<compile_context>
chip_gen: v7x
topology: tpu7x:2x2x1
jax: 0.10.0
libtpu: 0.0.40
codegen_flags: <defaults>
</compile_context>

<pallas_src>
import functools

import jax
import jax.numpy as jnp
from jax.experimental import pallas as pl
from jax.experimental.pallas import tpu as pltpu


def _softplus(x):
    # Numerically stable softplus: max(x, 0) + log1p(exp(-|x|)).
    return jnp.maximum(x, 0.0) + jnp.log1p(jnp.exp(-jnp.abs(x)))


def _sigmoid_via_tanh(z):
    # sigmoid(z) == 0.5 * (tanh(z / 2) + 1): single EUP transcendental.
    return 0.5 * jnp.tanh(0.5 * z) + 0.5


def _gamma_kernel(w1_ref, b1_ref, t_ref, w2_ref, b2_ref, w3_ref, out_ref,
                  *, inv_d_hidden):
    # Scalars from SMEM.
    w1 = _softplus(w1_ref[0])
    b1 = b1_ref[0]

    t = t_ref[...]                       # (1, TM) lane-dense
    x1 = w1 * t + b1                     # (1, TM)

    # (H, 1) columns. Recomputed per grid step: ~H EUP ops vs H*TM for the tanh
    # below (negligible), and it avoids any scratch-init ordering dependence
    # when the grid axis is sharded across cores ("parallel").
    sp_w2 = _softplus(w2_ref[...])                      # (H, 1)
    b2 = b2_ref[...]                                    # (H, 1)
    sp_w3 = _softplus(w3_ref[...]) * inv_d_hidden       # (H, 1)

    h = _sigmoid_via_tanh(sp_w2 * x1 + b2)              # (H, TM) VPU bcast + EUP tanh
    out = jnp.sum(h * sp_w3, axis=0, keepdims=True)     # (1, TM) sublane reduce (XLU)
    out_ref[...] = out + x1


def init_gamma_net_params(key, d_hidden=1024, gamma_0=-10.0, gamma_1=10.0):
    k2, k3 = jax.random.split(key)
    return {
        "w1": jnp.zeros((1,), jnp.float32),
        "b1": jnp.zeros((1,), jnp.float32),
        "w2": 0.02 * jax.random.normal(k2, (d_hidden, 1), jnp.float32),
        "b2": jnp.zeros((d_hidden,), jnp.float32),
        "w3": 0.02 * jax.random.normal(k3, (1, d_hidden), jnp.float32),
        "gamma": jnp.array([gamma_0, gamma_1], jnp.float32),
        "d_hidden": d_hidden,
    }


def gamma_net_forward(t, params, return_be=True, block_m=512):
    """Pallas forward matching GammaNet.forward(t, return_be)."""
    assert block_m % 128 == 0
    d_hidden = params["d_hidden"]

    t_flat = t.reshape(-1).astype(jnp.float32)
    if return_be:
        t_flat = jnp.concatenate(
            [jnp.array([0.0, 1.0], dtype=jnp.float32), t_flat], axis=0
        )
    m = t_flat.shape[0]

    # Lane-dense layout: pad M up to a multiple of 128; tile TM lanes per step.
    m128 = 128 * pl.cdiv(m, 128)
    tm = min(block_m, m128)
    m_pad = tm * pl.cdiv(m, tm)
    grid = (m_pad // tm,)

    t_row = jnp.zeros((1, m_pad), jnp.float32).at[0, :m].set(t_flat)

    w2_col = params["w2"].astype(jnp.float32)                        # (H, 1)
    b2_col = params["b2"].reshape(d_hidden, 1).astype(jnp.float32)   # (H, 1)
    w3_col = params["w3"].reshape(d_hidden, 1).astype(jnp.float32)   # (H, 1)

    kernel = functools.partial(_gamma_kernel, inv_d_hidden=1.0 / float(d_hidden))
    out_row = pl.pallas_call(
        kernel,
        out_shape=jax.ShapeDtypeStruct((1, m_pad), jnp.float32),
        grid=grid,
        in_specs=[
            pl.BlockSpec(memory_space=pltpu.MemorySpace.SMEM),       # w1 (1,)
            pl.BlockSpec(memory_space=pltpu.MemorySpace.SMEM),       # b1 (1,)
            pl.BlockSpec((1, tm), lambda i: (0, i)),                 # t row tile
            pl.BlockSpec((d_hidden, 1), lambda i: (0, 0)),           # w2 column
            pl.BlockSpec((d_hidden, 1), lambda i: (0, 0)),           # b2 column
            pl.BlockSpec((d_hidden, 1), lambda i: (0, 0)),           # w3 column
        ],
        out_specs=pl.BlockSpec((1, tm), lambda i: (0, i)),
        compiler_params=pltpu.CompilerParams(
            dimension_semantics=("parallel",),                        # megacore on v7x
        ),
    )(params["w1"], params["b1"], t_row, w2_col, b2_col, w3_col)

    out = out_row[0, :m]

    gamma = params["gamma"]
    gamma_0 = -jax.nn.logsumexp(-gamma, axis=-1)
    gamma_1 = jax.nn.logsumexp(gamma, axis=-1)

    if return_be:
        return out[2:], (out[0], out[1]), (gamma_0, gamma_1)
    return out, None, None


def _reference_forward(t, params, return_be=True):
    """Pure-JAX reference mirroring the PyTorch forward."""
    d_hidden = params["d_hidden"]
    t_flat = t.reshape(-1).astype(jnp.float32)
    if return_be:
        t_flat = jnp.concatenate([jnp.array([0.0, 1.0], jnp.float32), t_flat])
    x = t_flat.reshape(-1, 1)
    w1 = jax.nn.softplus(params["w1"])
    x1 = w1 * x + params["b1"]
    w2 = jax.nn.softplus(params["w2"])
    out = x1 @ w2.T + params["b2"]
    out = jax.nn.sigmoid(out)
    w3 = jax.nn.softplus(params["w3"]) / d_hidden
    out = out @ w3.T
    out = (out + x1).squeeze(-1)
    gamma = params["gamma"]
    g0 = -jax.nn.logsumexp(-gamma, axis=-1)
    g1 = jax.nn.logsumexp(gamma, axis=-1)
    if return_be:
        return out[2:], (out[0], out[1]), (g0, g1)
    return out, None, None


if __name__ == "__main__":
    key = jax.random.PRNGKey(0)
    kp, kt, kt2 = jax.random.split(key, 3)

    d_hidden = 256                    # small hidden size (module default is 1024)
    params = init_gamma_net_params(kp, d_hidden=d_hidden)

    # --- small case: seq of 8 timesteps, single grid step ---
    t = jax.random.uniform(kt, (8,), jnp.float32)
    out, (g_t0, g_t1), (gamma_0, gamma_1) = gamma_net_forward(t, params, return_be=True)
    jax.block_until_ready(out)
    jax.block_until_ready(g_t0)
    jax.block_until_ready(gamma_0)

    ref_out, (r0, r1), (rg0, rg1) = _reference_forward(t, params, return_be=True)
    assert jnp.allclose(out, ref_out, atol=1e-5, rtol=1e-5)
    assert jnp.allclose(g_t0, r0, atol=1e-5) and jnp.allclose(g_t1, r1, atol=1e-5)
    assert jnp.allclose(gamma_0, rg0) and jnp.allclose(gamma_1, rg1)

    # --- return_be=False path ---
    out_nb, _, _ = gamma_net_forward(t, params, return_be=False)
    ref_nb, _, _ = _reference_forward(t, params, return_be=False)
    jax.block_until_ready(out_nb)
    assert jnp.allclose(out_nb, ref_nb, atol=1e-5, rtol=1e-5)

    # --- larger M: exercises the multi-step grid (2 tiles of 512 lanes) ---
    t_big = jax.random.uniform(kt2, (700,), jnp.float32)
    out_b, (b0, b1), _ = gamma_net_forward(t_big, params, return_be=True)
    jax.block_until_ready(out_b)
    ref_b, (rb0, rb1), _ = _reference_forward(t_big, params, return_be=True)
    assert jnp.allclose(out_b, ref_b, atol=1e-5, rtol=1e-5)
    assert jnp.allclose(b0, rb0, atol=1e-5) and jnp.allclose(b1, rb1, atol=1e-5)

    print("KERNEL_OK")
</pallas_src>

<mosaic_0001>
module attributes {stable_mosaic.version = 11 : i64} {
  func.func @_gamma_kernel(%arg0: i32, %arg1: memref<1xf32, #tpu.memory_space<smem>>, %arg2: memref<1xf32, #tpu.memory_space<smem>>, %arg3: memref<1x128xf32, #tpu.memory_space<vmem>>, %arg4: memref<256x1xf32, #tpu.memory_space<vmem>>, %arg5: memref<256x1xf32, #tpu.memory_space<vmem>>, %arg6: memref<256x1xf32, #tpu.memory_space<vmem>>, %arg7: memref<1x128xf32, #tpu.memory_space<vmem>>) attributes {dimension_semantics = [#tpu.dimension_semantics<parallel>], iteration_bounds = array<i64: 1>, scalar_prefetch = 0 : i64, scratch_operands = 0 : i64, tpu.core_type = #tpu.core_type<tc>, window_params = [{transform_indices = @transform_0, window_bounds = array<i64: 1>}, {transform_indices = @transform_1, window_bounds = array<i64: 1>}, {transform_indices = @transform_2, window_bounds = array<i64: 1, 128>}, {pipeline_mode = #tpu.pipeline_mode<synchronous>, transform_indices = @transform_3, window_bounds = array<i64: 256, 1>}, {pipeline_mode = #tpu.pipeline_mode<synchronous>, transform_indices = @transform_4, window_bounds = array<i64: 256, 1>}, {pipeline_mode = #tpu.pipeline_mode<synchronous>, transform_indices = @transform_5, window_bounds = array<i64: 256, 1>}, {transform_indices = @transform_6, window_bounds = array<i64: 1, 128>}]} {
    %c0 = arith.constant 0 : index
    %0 = memref.load %arg1[%c0] : memref<1xf32, #tpu.memory_space<smem>>
    %cst = arith.constant 0.000000e+00 : f32
    %1 = arith.maximumf %0, %cst : f32
    %2 = math.absf %0 : f32
    %cst_0 = arith.constant 0.000000e+00 : f32
    %3 = arith.subf %cst_0, %2 : f32
    %4 = math.exp %3 : f32
    %5 = math.log1p %4 : f32
    %6 = arith.addf %1, %5 : f32
    %c0_1 = arith.constant 0 : index
    %7 = memref.load %arg2[%c0_1] : memref<1xf32, #tpu.memory_space<smem>>
    %c0_2 = arith.constant 0 : index
    %c0_3 = arith.constant 0 : index
    %8 = vector.load %arg3[%c0_2, %c0_3] : memref<1x128xf32, #tpu.memory_space<vmem>>, vector<1x128xf32>
    %9 = vector.broadcast %6 : f32 to vector<1x128xf32>
    %10 = arith.mulf %9, %8 : vector<1x128xf32>
    %11 = vector.broadcast %7 : f32 to vector<1x128xf32>
    %12 = arith.addf %10, %11 : vector<1x128xf32>
    %c0_4 = arith.constant 0 : index
    %c0_5 = arith.constant 0 : index
    %13 = vector.load %arg4[%c0_4, %c0_5] : memref<256x1xf32, #tpu.memory_space<vmem>>, vector<256x1xf32>
    %cst_6 = arith.constant 0.000000e+00 : f32
    %14 = vector.broadcast %cst_6 : f32 to vector<256x1xf32>
    %15 = arith.maximumf %13, %14 : vector<256x1xf32>
    %16 = math.absf %13 : vector<256x1xf32>
    %cst_7 = arith.constant 0.000000e+00 : f32
    %17 = vector.broadcast %cst_7 : f32 to vector<256x1xf32>
    %18 = arith.subf %17, %16 : vector<256x1xf32>
    %19 = math.exp %18 : vector<256x1xf32>
    %20 = math.log1p %19 : vector<256x1xf32>
    %21 = arith.addf %15, %20 : vector<256x1xf32>
    %c0_8 = arith.constant 0 : index
    %c0_9 = arith.constant 0 : index
    %22 = vector.load %arg5[%c0_8, %c0_9] : memref<256x1xf32, #tpu.memory_space<vmem>>, vector<256x1xf32>
    %c0_10 = arith.constant 0 : index
    %c0_11 = arith.constant 0 : index
    %23 = vector.load %arg6[%c0_10, %c0_11] : memref<256x1xf32, #tpu.memory_space<vmem>>, vector<256x1xf32>
    %cst_12 = arith.constant 0.000000e+00 : f32
    %24 = vector.broadcast %cst_12 : f32 to vector<256x1xf32>
    %25 = arith.maximumf %23, %24 : vector<256x1xf32>
    %26 = math.absf %23 : vector<256x1xf32>
    %cst_13 = arith.constant 0.000000e+00 : f32
    %27 = vector.broadcast %cst_13 : f32 to vector<256x1xf32>
    %28 = arith.subf %27, %26 : vector<256x1xf32>
    %29 = math.exp %28 : vector<256x1xf32>
    %30 = math.log1p %29 : vector<256x1xf32>
    %31 = arith.addf %25, %30 : vector<256x1xf32>
    %cst_14 = arith.constant 3.906250e-03 : f32
    %32 = vector.broadcast %cst_14 : f32 to vector<256x1xf32>
    %33 = arith.mulf %31, %32 : vector<256x1xf32>
    %34 = vector.broadcast %21 : vector<256x1xf32> to vector<256x128xf32>
    %35 = vector.broadcast %12 : vector<1x128xf32> to vector<256x128xf32>
    %36 = arith.mulf %34, %35 : vector<256x128xf32>
    %37 = vector.broadcast %22 : vector<256x1xf32> to vector<256x128xf32>
    %38 = arith.addf %36, %37 : vector<256x128xf32>
    %cst_15 = arith.constant 5.000000e-01 : f32
    %39 = vector.broadcast %cst_15 : f32 to vector<256x128xf32>
    %40 = arith.mulf %39, %38 : vector<256x128xf32>
    %41 = math.tanh %40 : vector<256x128xf32>
    %cst_16 = arith.constant 5.000000e-01 : f32
    %42 = vector.broadcast %cst_16 : f32 to vector<256x128xf32>
    %43 = arith.mulf %42, %41 : vector<256x128xf32>
    %cst_17 = arith.constant 5.000000e-01 : f32
    %44 = vector.broadcast %cst_17 : f32 to vector<256x128xf32>
    %45 = arith.addf %43, %44 : vector<256x128xf32>
    %46 = vector.broadcast %33 : vector<256x1xf32> to vector<256x128xf32>
    %47 = arith.mulf %45, %46 : vector<256x128xf32>
    %cst_18 = arith.constant dense<0.000000e+00> : vector<128xf32>
    %48 = vector.multi_reduction <add>, %47, %cst_18 [0] : vector<256x128xf32> to vector<128xf32>
    %49 = vector.shape_cast %48 : vector<128xf32> to vector<1x128xf32>
    %50 = arith.addf %49, %12 : vector<1x128xf32>
    %c0_19 = arith.constant 0 : index
    %c0_20 = arith.constant 0 : index
    %51 = vector.load %arg7[%c0_19, %c0_20] : memref<1x128xf32, #tpu.memory_space<vmem>>, vector<1x128xf32>
    tpu.vector_store %arg7[%c0_19, %c0_20], %50 {strides = array<i32>} : memref<1x128xf32, #tpu.memory_space<vmem>>, vector<1x128xf32>,
    return
  }
  func.func @transform_0(%arg0: i32) -> i32 {
    %c0_i32 = arith.constant 0 : i32
    %c0_i32_0 = arith.constant 0 : i32
    return %c0_i32 : i32
  }
  func.func @transform_1(%arg0: i32) -> i32 {
    %c0_i32 = arith.constant 0 : i32
    %c0_i32_0 = arith.constant 0 : i32
    return %c0_i32 : i32
  }
  func.func @transform_2(%arg0: i32) -> (i32, i32) {
    %c0_i32 = arith.constant 0 : i32
    %c0_i32_0 = arith.constant 0 : i32
    return %c0_i32, %arg0 : i32, i32
  }
  func.func @transform_3(%arg0: i32) -> (i32, i32) {
    %c0_i32 = arith.constant 0 : i32
    %c0_i32_0 = arith.constant 0 : i32
    %c0_i32_1 = arith.constant 0 : i32
    return %c0_i32, %c0_i32_0 : i32, i32
  }
  func.func @transform_4(%arg0: i32) -> (i32, i32) {
    %c0_i32 = arith.constant 0 : i32
    %c0_i32_0 = arith.constant 0 : i32
    %c0_i32_1 = arith.constant 0 : i32
    return %c0_i32, %c0_i32_0 : i32, i32
  }
  func.func @transform_5(%arg0: i32) -> (i32, i32) {
    %c0_i32 = arith.constant 0 : i32
    %c0_i32_0 = arith.constant 0 : i32
    %c0_i32_1 = arith.constant 0 : i32
    return %c0_i32, %c0_i32_0 : i32, i32
  }
  func.func @transform_6(%arg0: i32) -> (i32, i32) {
    %c0_i32 = arith.constant 0 : i32
    %c0_i32_0 = arith.constant 0 : i32
    return %c0_i32, %arg0 : i32, i32
  }
}

</mosaic_0001>

<llo_original>
// kernel: tpu_custom_call.1
$region0: #{tpu_custom_call.1}
  #allocation0 [shape = 'u32[]', space=smem, size = 0x4, offset = 0x4, fixed_abs, tag = 'smem constant byte address 0x4 - core index']
  #allocation1 [shape = 'u32[144,128]{1,0:T(1,128)}', space=vmem, size = 0x12000, scoped, tag = 'internal scratch']
  #allocation2 [shape = 'f32[1]{0:T(128)S(6)}', space=smem, size = 0x200, scoped, tag = 'scoped memory for tpu_custom_call.1']
  #allocation3 [shape = 'f32[1]{0:T(128)S(6)}', space=smem, size = 0x200, scoped, tag = 'scoped memory for tpu_custom_call.1']
  %s0 = inlined_call_operand.<no memory space> [shape: f32[1], index: 0, kind: input, shape index: {}]
  %s1 = inlined_call_operand.<no memory space> [shape: f32[1], index: 1, kind: input, shape index: {}]
  %s2 = inlined_call_operand.vmem [shape: f32[1,128], index: 2, kind: input, shape index: {}]
  %s3 = inlined_call_operand.vmem [shape: f32[256,1], index: 3, kind: input, shape index: {}]
  %s4 = inlined_call_operand.vmem [shape: f32[256,1], index: 4, kind: input, shape index: {}]
  %s5 = inlined_call_operand.vmem [shape: f32[256,1], index: 5, kind: input, shape index: {}]
  %s6 = inlined_call_operand.hbm [shape: f32[1,128], index: 6, kind: output, shape index: {}]
  %s7 = sld [smem:[#allocation0]]
  $region34: #{tpu_custom_call.1} parent=0
    _
  %s9 = ssub.s32 1, %s7
  %s10 = scalar_select 0, %s9, %s7
  %11 = sst [smem:[#allocation2]] %s0
  %12 = sst [smem:[#allocation3]] %s1
  $region1: #{tpu_custom_call.1} parent=0
    #allocation4 [shape = 'u8[512]{0}', space=vmem, size = 0x400, scoped, tag = 'output window, operand 0, single buffered']
    #allocation5 [shape = 's32[1]{0}', space=sflag, size = 0x4, scoped, tag = 'scoped memory for tpu_custom_call.1']
    %13 = vsyncpa [#allocation5], 0
    // Predicated region
    $region2: #{tpu_custom_call.1} parent=1 // pred_check
      _
    $region3: #{tpu_custom_call.1} parent=1 // pred_check_branch
      %15 = sbr.rel (0) target = $region5
    $region4: #{tpu_custom_call.1} parent=1 // pred_region
      _
    $region5: #{tpu_custom_call.1} parent=1 // pred_fallthru
      _
    // Predicated region
    $region6: #{tpu_custom_call.1} parent=1 // pred_check
      _
    $region7: #{tpu_custom_call.1} parent=1 // pred_check_branch
      %17 = sbr.rel (0) target = $region9
    $region8: #{tpu_custom_call.1} parent=1 // pred_region
      _
    $region9: #{tpu_custom_call.1} parent=1 // pred_fallthru
      _
    // Predicated region
    $region10: #{tpu_custom_call.1} parent=1 // pred_check
      _
    $region11: #{tpu_custom_call.1} parent=1 // pred_check_branch
      %19 = sbr.rel (0) target = $region13
    $region12: #{tpu_custom_call.1} parent=1 // pred_region
      _
    $region13: #{tpu_custom_call.1} parent=1 // pred_fallthru
      _
    // Predicated region
    $region14: #{tpu_custom_call.1} parent=1 // pred_check
      _
    $region15: #{tpu_custom_call.1} parent=1 // pred_check_branch
      %21 = sbr.rel (0) target = $region17
    $region16: #{tpu_custom_call.1} parent=1 // pred_region
      _
    $region17: #{tpu_custom_call.1} parent=1 // pred_fallthru
      _
    // Predicated region
    $region18: #{tpu_custom_call.1} parent=1 // pred_check
      _
    $region19: #{tpu_custom_call.1} parent=1 // pred_check_branch
      %23 = sbr.rel (0) target = $region21
    $region20: #{tpu_custom_call.1} parent=1 // pred_region
      _
    $region21: #{tpu_custom_call.1} parent=1 // pred_fallthru
      _
    // Predicated region
    $region22: #{tpu_custom_call.1} parent=1 // pred_check
      _
    $region23: #{tpu_custom_call.1} parent=1 // pred_check_branch
      %25 = sbr.rel (0) target = $region25
    $region24: #{tpu_custom_call.1} parent=1 // pred_region
      _
    $region25: #{tpu_custom_call.1} parent=1 // pred_fallthru
      _
    %s26 = sld [smem:[#allocation2]]
    %s27 = smax.f32 %s26, 0.0
    %s28 = sand.u32 2147483647, %s26
    %s29 = ssub.f32 0.0, %s28
    %v30 = vstv %s29
    %v31 = vmul.f32 %v30, 1.442695
    %v32 = vpow.pop %v31
    %s33 = vtos %v32
    %v34 = vstv %s33
    %v35 = vadd.f32 %v34, 1.0
    %v36 = vlog2.pop %v35
    %v37 = vmul.f32 %v36, 0.6931472
    %v38 = vmul.f32 -0.5, %v34
    %v39 = vadd.f32 %v38, 1.0
    %v40 = vmul.f32 %v39, %v34
    %v41 = vand.u32 2147483647, %v34
    %vm42 = vcmp.lt.f32.partialorder %v41, 0.0004427343
    %v43 = vsel %vm42, %v40, %v37
    %s44 = vtos %v43
    %s45 = sadd.f32 %s27, %s44
    %s46 = sld [smem:[#allocation3]]
    %v47 = vld [vmem:[%s2] sm:$0x1]
    %v48 = vstv %s45
    %v49 = vmul.f32 %v48, %v47
    %v50 = vstv %s46
    %v51 = vadd.f32 %v49, %v50
    %v52 = vld [vmem:[%s3] sm:$0xff]
    %v53 = vld [vmem:[%s3 + $0x8] sm:$0xff]
    %v54 = vld [vmem:[%s3 + $0x10] sm:$0xff]
    %v55 = vld [vmem:[%s3 + $0x18] sm:$0xff]
    %v56 = vld [vmem:[%s3 + $0x20] sm:$0xff]
    %v57 = vld [vmem:[%s3 + $0x28] sm:$0xff]
    %v58 = vld [vmem:[%s3 + $0x30] sm:$0xff]
    %v59 = vld [vmem:[%s3 + $0x38] sm:$0xff]
    %v60 = vld [vmem:[%s3 + $0x40] sm:$0xff]
    %v61 = vld [vmem:[%s3 + $0x48] sm:$0xff]
    %v62 = vld [vmem:[%s3 + $0x50] sm:$0xff]
    %v63 = vld [vmem:[%s3 + $0x58] sm:$0xff]
    %v64 = vld [vmem:[%s3 + $0x60] sm:$0xff]
    %v65 = vld [vmem:[%s3 + $0x68] sm:$0xff]
    %v66 = vld [vmem:[%s3 + $0x70] sm:$0xff]
    %v67 = vld [vmem:[%s3 + $0x78] sm:$0xff]
    %v68 = vld [vmem:[%s3 + $0x80] sm:$0xff]
    %v69 = vld [vmem:[%s3 + $0x88] sm:$0xff]
    %v70 = vld [vmem:[%s3 + $0x90] sm:$0xff]
    %v71 = vld [vmem:[%s3 + $0x98] sm:$0xff]
    %v72 = vld [vmem:[%s3 + $0xa0] sm:$0xff]
    %v73 = vld [vmem:[%s3 + $0xa8] sm:$0xff]
    %v74 = vld [vmem:[%s3 + $0xb0] sm:$0xff]
    %v75 = vld [vmem:[%s3 + $0xb8] sm:$0xff]
    %v76 = vld [vmem:[%s3 + $0xc0] sm:$0xff]
    %v77 = vld [vmem:[%s3 + $0xc8] sm:$0xff]
    %v78 = vld [vmem:[%s3 + $0xd0] sm:$0xff]
    %v79 = vld [vmem:[%s3 + $0xd8] sm:$0xff]
    %v80 = vld [vmem:[%s3 + $0xe0] sm:$0xff]
    %v81 = vld [vmem:[%s3 + $0xe8] sm:$0xff]
    %v82 = vld [vmem:[%s3 + $0xf0] sm:$0xff]
    %v83 = vld [vmem:[%s3 + $0xf8] sm:$0xff]
    %v84 = vmax.f32 %v52, 0.0
    %v85 = vmax.f32 %v53, 0.0
    %v86 = vmax.f32 %v54, 0.0
    %v87 = vmax.f32 %v55, 0.0
    %v88 = vmax.f32 %v56, 0.0
    %v89 = vmax.f32 %v57, 0.0
    %v90 = vmax.f32 %v58, 0.0
    %v91 = vmax.f32 %v59, 0.0
    %v92 = vmax.f32 %v60, 0.0
    %v93 = vmax.f32 %v61, 0.0
    %v94 = vmax.f32 %v62, 0.0
    %v95 = vmax.f32 %v63, 0.0
    %v96 = vmax.f32 %v64, 0.0
    %v97 = vmax.f32 %v65, 0.0
    %v98 = vmax.f32 %v66, 0.0
    %v99 = vmax.f32 %v67, 0.0
    %v100 = vmax.f32 %v68, 0.0
    %v101 = vmax.f32 %v69, 0.0
    %v102 = vmax.f32 %v70, 0.0
    %v103 = vmax.f32 %v71, 0.0
    %v104 = vmax.f32 %v72, 0.0
    %v105 = vmax.f32 %v73, 0.0
    %v106 = vmax.f32 %v74, 0.0
    %v107 = vmax.f32 %v75, 0.0
    %v108 = vmax.f32 %v76, 0.0
    %v109 = vmax.f32 %v77, 0.0
    %v110 = vmax.f32 %v78, 0.0
    %v111 = vmax.f32 %v79, 0.0
    %v112 = vmax.f32 %v80, 0.0
    %v113 = vmax.f32 %v81, 0.0
    %v114 = vmax.f32 %v82, 0.0
    %v115 = vmax.f32 %v83, 0.0
    %v116 = vand.u32 2147483647, %v52
    %v117 = vand.u32 2147483647, %v53
    %v118 = vand.u32 2147483647, %v54
    %v119 = vand.u32 2147483647, %v55
    %v120 = vand.u32 2147483647, %v56
    %v121 = vand.u32 2147483647, %v57
    %v122 = vand.u32 2147483647, %v58
    %v123 = vand.u32 2147483647, %v59
    %v124 = vand.u32 2147483647, %v60
    %v125 = vand.u32 2147483647, %v61
    %v126 = vand.u32 2147483647, %v62
    %v127 = vand.u32 2147483647, %v63
    %v128 = vand.u32 2147483647, %v64
    %v129 = vand.u32 2147483647, %v65
    %v130 = vand.u32 2147483647, %v66
    %v131 = vand.u32 2147483647, %v67
    %v132 = vand.u32 2147483647, %v68
    %v133 = vand.u32 2147483647, %v69
    %v134 = vand.u32 2147483647, %v70
    %v135 = vand.u32 2147483647, %v71
    %v136 = vand.u32 2147483647, %v72
    %v137 = vand.u32 2147483647, %v73
    %v138 = vand.u32 2147483647, %v74
    %v139 = vand.u32 2147483647, %v75
    %v140 = vand.u32 2147483647, %v76
    %v141 = vand.u32 2147483647, %v77
    %v142 = vand.u32 2147483647, %v78
    %v143 = vand.u32 2147483647, %v79
    %v144 = vand.u32 2147483647, %v80
    %v145 = vand.u32 2147483647, %v81
    %v146 = vand.u32 2147483647, %v82
    %v147 = vand.u32 2147483647, %v83
    %v148 = vsub.f32 0.0, %v116
    %v149 = vsub.f32 0.0, %v117
    %v150 = vsub.f32 0.0, %v118
    %v151 = vsub.f32 0.0, %v119
    %v152 = vsub.f32 0.0, %v120
    %v153 = vsub.f32 0.0, %v121
    %v154 = vsub.f32 0.0, %v122
    %v155 = vsub.f32 0.0, %v123
    %v156 = vsub.f32 0.0, %v124
    %v157 = vsub.f32 0.0, %v125
    %v158 = vsub.f32 0.0, %v126
    %v159 = vsub.f32 0.0, %v127
    %v160 = vsub.f32 0.0, %v128
    %v161 = vsub.f32 0.0, %v129
    %v162 = vsub.f32 0.0, %v130
    %v163 = vsub.f32 0.0, %v131
    %v164 = vsub.f32 0.0, %v132
    %v165 = vsub.f32 0.0, %v133
    %v166 = vsub.f32 0.0, %v134
    %v167 = vsub.f32 0.0, %v135
    %v168 = vsub.f32 0.0, %v136
    %v169 = vsub.f32 0.0, %v137
    %v170 = vsub.f32 0.0, %v138
    %v171 = vsub.f32 0.0, %v139
    %v172 = vsub.f32 0.0, %v140
    %v173 = vsub.f32 0.0, %v141
    %v174 = vsub.f32 0.0, %v142
    %v175 = vsub.f32 0.0, %v143
    %v176 = vsub.f32 0.0, %v144
    %v177 = vsub.f32 0.0, %v145
    %v178 = vsub.f32 0.0, %v146
    %v179 = vsub.f32 0.0, %v147
    %v180 = vmul.f32 %v148, 1.442695
    %v181 = vpow.pop %v180
    %v182 = vmul.f32 %v149, 1.442695
    %v183 = vpow.pop %v182
    %v184 = vmul.f32 %v150, 1.442695
    %v185 = vpow.pop %v184
    %v186 = vmul.f32 %v151, 1.442695
    %v187 = vpow.pop %v186
    %v188 = vmul.f32 %v152, 1.442695
    %v189 = vpow.pop %v188
    %v190 = vmul.f32 %v153, 1.442695
    %v191 = vpow.pop %v190
    %v192 = vmul.f32 %v154, 1.442695
    %v193 = vpow.pop %v192
    %v194 = vmul.f32 %v155, 1.442695
    %v195 = vpow.pop %v194
    %v196 = vmul.f32 %v156, 1.442695
    %v197 = vpow.pop %v196
    %v198 = vmul.f32 %v157, 1.442695
    %v199 = vpow.pop %v198
    %v200 = vmul.f32 %v158, 1.442695
    %v201 = vpow.pop %v200
    %v202 = vmul.f32 %v159, 1.442695
    %v203 = vpow.pop %v202
    %v204 = vmul.f32 %v160, 1.442695
    %v205 = vpow.pop %v204
    %v206 = vmul.f32 %v161, 1.442695
    %v207 = vpow.pop %v206
    %v208 = vmul.f32 %v162, 1.442695
    %v209 = vpow.pop %v208
    %v210 = vmul.f32 %v163, 1.442695
    %v211 = vpow.pop %v210
    %v212 = vmul.f32 %v164, 1.442695
    %v213 = vpow.pop %v212
    %v214 = vmul.f32 %v165, 1.442695
    %v215 = vpow.pop %v214
    %v216 = vmul.f32 %v166, 1.442695
    %v217 = vpow.pop %v216
    %v218 = vmul.f32 %v167, 1.442695
    %v219 = vpow.pop %v218
    %v220 = vmul.f32 %v168, 1.442695
    %v221 = vpow.pop %v220
    %v222 = vmul.f32 %v169, 1.442695
    %v223 = vpow.pop %v222
    %v224 = vmul.f32 %v170, 1.442695
    %v225 = vpow.pop %v224
    %v226 = vmul.f32 %v171, 1.442695
    %v227 = vpow.pop %v226
    %v228 = vmul.f32 %v172, 1.442695
    %v229 = vpow.pop %v228
    %v230 = vmul.f32 %v173, 1.442695
    %v231 = vpow.pop %v230
    %v232 = vmul.f32 %v174, 1.442695
    %v233 = vpow.pop %v232
    %v234 = vmul.f32 %v175, 1.442695
    %v235 = vpow.pop %v234
    %v236 = vmul.f32 %v176, 1.442695
    %v237 = vpow.pop %v236
    %v238 = vmul.f32 %v177, 1.442695
    %v239 = vpow.pop %v238
    %v240 = vmul.f32 %v178, 1.442695
    %v241 = vpow.pop %v240
    %v242 = vmul.f32 %v179, 1.442695
    %v243 = vpow.pop %v242
    %v244 = vadd.f32 %v181, 1.0
    %v245 = vlog2.pop %v244
    %v246 = vmul.f32 %v245, 0.6931472
    %v247 = vmul.f32 -0.5, %v181
    %v248 = vadd.f32 %v247, 1.0
    %v249 = vmul.f32 %v248, %v181
    %v250 = vand.u32 2147483647, %v181
    %vm251 = vcmp.lt.f32.partialorder %v250, 0.0004427343
    %v252 = vsel %vm251, %v249, %v246
    %v253 = vadd.f32 %v183, 1.0
    %v254 = vlog2.pop %v253
    %v255 = vmul.f32 %v254, 0.6931472
    %v256 = vmul.f32 -0.5, %v183
    %v257 = vadd.f32 %v256, 1.0
    %v258 = vmul.f32 %v257, %v183
    %v259 = vand.u32 2147483647, %v183
    %vm260 = vcmp.lt.f32.partialorder %v259, 0.0004427343
    %v261 = vsel %vm260, %v258, %v255
    %v262 = vadd.f32 %v185, 1.0
    %v263 = vlog2.pop %v262
    %v264 = vmul.f32 %v263, 0.6931472
    %v265 = vmul.f32 -0.5, %v185
    %v266 = vadd.f32 %v265, 1.0
    %v267 = vmul.f32 %v266, %v185
    %v268 = vand.u32 2147483647, %v185
    %vm269 = vcmp.lt.f32.partialorder %v268, 0.0004427343
    %v270 = vsel %vm269, %v267, %v264
    %v271 = vadd.f32 %v187, 1.0
    %v272 = vlog2.pop %v271
    %v273 = vmul.f32 %v272, 0.6931472
    %v274 = vmul.f32 -0.5, %v187
    %v275 = vadd.f32 %v274, 1.0
    %v276 = vmul.f32 %v275, %v187
    %v277 = vand.u32 2147483647, %v187
    %vm278 = vcmp.lt.f32.partialorder %v277, 0.0004427343
    %v279 = vsel %vm278, %v276, %v273
    %v280 = vadd.f32 %v189, 1.0
    %v281 = vlog2.pop %v280
    %v282 = vmul.f32 %v281, 0.6931472
    %v283 = vmul.f32 -0.5, %v189
    %v284 = vadd.f32 %v283, 1.0
    %v285 = vmul.f32 %v284, %v189
    %v286 = vand.u32 2147483647, %v189
    %vm287 = vcmp.lt.f32.partialorder %v286, 0.0004427343
    %v288 = vsel %vm287, %v285, %v282
    %v289 = vadd.f32 %v191, 1.0
    %v290 = vlog2.pop %v289
    %v291 = vmul.f32 %v290, 0.6931472
    %v292 = vmul.f32 -0.5, %v191
    %v293 = vadd.f32 %v292, 1.0
    %v294 = vmul.f32 %v293, %v191
    %v295 = vand.u32 2147483647, %v191
    %vm296 = vcmp.lt.f32.partialorder %v295, 0.0004427343
    %v297 = vsel %vm296, %v294, %v291
    %v298 = vadd.f32 %v193, 1.0
    %v299 = vlog2.pop %v298
    %v300 = vmul.f32 %v299, 0.6931472
    %v301 = vmul.f32 -0.5, %v193
    %v302 = vadd.f32 %v301, 1.0
    %v303 = vmul.f32 %v302, %v193
    %v304 = vand.u32 2147483647, %v193
    %vm305 = vcmp.lt.f32.partialorder %v304, 0.0004427343
    %v306 = vsel %vm305, %v303, %v300
    %v307 = vadd.f32 %v195, 1.0
    %v308 = vlog2.pop %v307
    %v309 = vmul.f32 %v308, 0.6931472
    %v310 = vmul.f32 -0.5, %v195
    %v311 = vadd.f32 %v310, 1.0
    %v312 = vmul.f32 %v311, %v195
    %v313 = vand.u32 2147483647, %v195
    %vm314 = vcmp.lt.f32.partialorder %v313, 0.0004427343
    %v315 = vsel %vm314, %v312, %v309
    %v316 = vadd.f32 %v197, 1.0
    %v317 = vlog2.pop %v316
    %v318 = vmul.f32 %v317, 0.6931472
    %v319 = vmul.f32 -0.5, %v197
    %v320 = vadd.f32 %v319, 1.0
    %v321 = vmul.f32 %v320, %v197
    %v322 = vand.u32 2147483647, %v197
    %vm323 = vcmp.lt.f32.partialorder %v322, 0.0004427343
    %v324 = vsel %vm323, %v321, %v318
    %v325 = vadd.f32 %v199, 1.0
    %v326 = vlog2.pop %v325
    %v327 = vmul.f32 %v326, 0.6931472
    %v328 = vmul.f32 -0.5, %v199
    %v329 = vadd.f32 %v328, 1.0
    %v330 = vmul.f32 %v329, %v199
    %v331 = vand.u32 2147483647, %v199
    %vm332 = vcmp.lt.f32.partialorder %v331, 0.0004427343
    %v333 = vsel %vm332, %v330, %v327
    %v334 = vadd.f32 %v201, 1.0
    %v335 = vlog2.pop %v334
    %v336 = vmul.f32 %v335, 0.6931472
    %v337 = vmul.f32 -0.5, %v201
    %v338 = vadd.f32 %v337, 1.0
    %v339 = vmul.f32 %v338, %v201
    %v340 = vand.u32 2147483647, %v201
    %vm341 = vcmp.lt.f32.partialorder %v340, 0.0004427343
    %v342 = vsel %vm341, %v339, %v336
    %v343 = vadd.f32 %v203, 1.0
    %v344 = vlog2.pop %v343
    %v345 = vmul.f32 %v344, 0.6931472
    %v346 = vmul.f32 -0.5, %v203
    %v347 = vadd.f32 %v346, 1.0
    %v348 = vmul.f32 %v347, %v203
    %v349 = vand.u32 2147483647, %v203
    %vm350 = vcmp.lt.f32.partialorder %v349, 0.0004427343
    %v351 = vsel %vm350, %v348, %v345
    %v352 = vadd.f32 %v205, 1.0
    %v353 = vlog2.pop %v352
    %v354 = vmul.f32 %v353, 0.6931472
    %v355 = vmul.f32 -0.5, %v205
    %v356 = vadd.f32 %v355, 1.0
    %v357 = vmul.f32 %v356, %v205
    %v358 = vand.u32 2147483647, %v205
    %vm359 = vcmp.lt.f32.partialorder %v358, 0.0004427343
    %v360 = vsel %vm359, %v357, %v354
    %v361 = vadd.f32 %v207, 1.0
    %v362 = vlog2.pop %v361
    %v363 = vmul.f32 %v362, 0.6931472
    %v364 = vmul.f32 -0.5, %v207
    %v365 = vadd.f32 %v364, 1.0
    %v366 = vmul.f32 %v365, %v207
    %v367 = vand.u32 2147483647, %v207
    %vm368 = vcmp.lt.f32.partialorder %v367, 0.0004427343
    %v369 = vsel %vm368, %v366, %v363
    %v370 = vadd.f32 %v209, 1.0
    %v371 = vlog2.pop %v370
    %v372 = vmul.f32 %v371, 0.6931472
    %v373 = vmul.f32 -0.5, %v209
    %v374 = vadd.f32 %v373, 1.0
    %v375 = vmul.f32 %v374, %v209
    %v376 = vand.u32 2147483647, %v209
    %vm377 = vcmp.lt.f32.partialorder %v376, 0.0004427343
    %v378 = vsel %vm377, %v375, %v372
    %v379 = vadd.f32 %v211, 1.0
    %v380 = vlog2.pop %v379
    %v381 = vmul.f32 %v380, 0.6931472
    %v382 = vmul.f32 -0.5, %v211
    %v383 = vadd.f32 %v382, 1.0
    %v384 = vmul.f32 %v383, %v211
    %v385 = vand.u32 2147483647, %v211
    %vm386 = vcmp.lt.f32.partialorder %v385, 0.0004427343
    %v387 = vsel %vm386, %v384, %v381
    %v388 = vadd.f32 %v213, 1.0
    %v389 = vlog2.pop %v388
    %v390 = vmul.f32 %v389, 0.6931472
    %v391 = vmul.f32 -0.5, %v213
    %v392 = vadd.f32 %v391, 1.0
    %v393 = vmul.f32 %v392, %v213
    %v394 = vand.u32 2147483647, %v213
    %vm395 = vcmp.lt.f32.partialorder %v394, 0.0004427343
    %v396 = vsel %vm395, %v393, %v390
    %v397 = vadd.f32 %v215, 1.0
    %v398 = vlog2.pop %v397
    %v399 = vmul.f32 %v398, 0.6931472
    %v400 = vmul.f32 -0.5, %v215
    %v401 = vadd.f32 %v400, 1.0
    %v402 = vmul.f32 %v401, %v215
    %v403 = vand.u32 2147483647, %v215
    %vm404 = vcmp.lt.f32.partialorder %v403, 0.0004427343
    %v405 = vsel %vm404, %v402, %v399
    %v406 = vadd.f32 %v217, 1.0
    %v407 = vlog2.pop %v406
    %v408 = vmul.f32 %v407, 0.6931472
    %v409 = vmul.f32 -0.5, %v217
    %v410 = vadd.f32 %v409, 1.0
    %v411 = vmul.f32 %v410, %v217
    %v412 = vand.u32 2147483647, %v217
    %vm413 = vcmp.lt.f32.partialorder %v412, 0.0004427343
    %v414 = vsel %vm413, %v411, %v408
    %v415 = vadd.f32 %v219, 1.0
    %v416 = vlog2.pop %v415
    %v417 = vmul.f32 %v416, 0.6931472
    %v418 = vmul.f32 -0.5, %v219
    %v419 = vadd.f32 %v418, 1.0
    %v420 = vmul.f32 %v419, %v219
    %v421 = vand.u32 2147483647, %v219
    %vm422 = vcmp.lt.f32.partialorder %v421, 0.0004427343
    %v423 = vsel %vm422, %v420, %v417
    %v424 = vadd.f32 %v221, 1.0
    %v425 = vlog2.pop %v424
    %v426 = vmul.f32 %v425, 0.6931472
    %v427 = vmul.f32 -0.5, %v221
    %v428 = vadd.f32 %v427, 1.0
    %v429 = vmul.f32 %v428, %v221
    %v430 = vand.u32 2147483647, %v221
    %vm431 = vcmp.lt.f32.partialorder %v430, 0.0004427343
    %v432 = vsel %vm431, %v429, %v426
    %v433 = vadd.f32 %v223, 1.0
    %v434 = vlog2.pop %v433
    %v435 = vmul.f32 %v434, 0.6931472
    %v436 = vmul.f32 -0.5, %v223
    %v437 = vadd.f32 %v436, 1.0
    %v438 = vmul.f32 %v437, %v223
    %v439 = vand.u32 2147483647, %v223
    %vm440 = vcmp.lt.f32.partialorder %v439, 0.0004427343
    %v441 = vsel %vm440, %v438, %v435
    %v442 = vadd.f32 %v225, 1.0
    %v443 = vlog2.pop %v442
    %v444 = vmul.f32 %v443, 0.6931472
    %v445 = vmul.f32 -0.5, %v225
    %v446 = vadd.f32 %v445, 1.0
    %v447 = vmul.f32 %v446, %v225
    %v448 = vand.u32 2147483647, %v225
    %vm449 = vcmp.lt.f32.partialorder %v448, 0.0004427343
    %v450 = vsel %vm449, %v447, %v444
    %v451 = vadd.f32 %v227, 1.0
    %v452 = vlog2.pop %v451
    %v453 = vmul.f32 %v452, 0.6931472
    %v454 = vmul.f32 -0.5, %v227
    %v455 = vadd.f32 %v454, 1.0
    %v456 = vmul.f32 %v455, %v227
    %v457 = vand.u32 2147483647, %v227
    %vm458 = vcmp.lt.f32.partialorder %v457, 0.0004427343
    %v459 = vsel %vm458, %v456, %v453
    %v460 = vadd.f32 %v229, 1.0
    %v461 = vlog2.pop %v460
    %v462 = vmul.f32 %v461, 0.6931472
    %v463 = vmul.f32 -0.5, %v229
    %v464 = vadd.f32 %v463, 1.0
    %v465 = vmul.f32 %v464, %v229
    %v466 = vand.u32 2147483647, %v229
    %vm467 = vcmp.lt.f32.partialorder %v466, 0.0004427343
    %v468 = vsel %vm467, %v465, %v462
    %v469 = vadd.f32 %v231, 1.0
    %v470 = vlog2.pop %v469
    %v471 = vmul.f32 %v470, 0.6931472
    %v472 = vmul.f32 -0.5, %v231
    %v473 = vadd.f32 %v472, 1.0
    %v474 = vmul.f32 %v473, %v231
    %v475 = vand.u32 2147483647, %v231
    %vm476 = vcmp.lt.f32.partialorder %v475, 0.0004427343
    %v477 = vsel %vm476, %v474, %v471
    %v478 = vadd.f32 %v233, 1.0
    %v479 = vlog2.pop %v478
    %v480 = vmul.f32 %v479, 0.6931472
    %v481 = vmul.f32 -0.5, %v233
    %v482 = vadd.f32 %v481, 1.0
    %v483 = vmul.f32 %v482, %v233
    %v484 = vand.u32 2147483647, %v233
    %vm485 = vcmp.lt.f32.partialorder %v484, 0.0004427343
    %v486 = vsel %vm485, %v483, %v480
    %v487 = vadd.f32 %v235, 1.0
    %v488 = vlog2.pop %v487
    %v489 = vmul.f32 %v488, 0.6931472
    %v490 = vmul.f32 -0.5, %v235
    %v491 = vadd.f32 %v490, 1.0
    %v492 = vmul.f32 %v491, %v235
    %v493 = vand.u32 2147483647, %v235
    %vm494 = vcmp.lt.f32.partialorder %v493, 0.0004427343
    %v495 = vsel %vm494, %v492, %v489
    %v496 = vadd.f32 %v237, 1.0
    %v497 = vlog2.pop %v496
    %v498 = vmul.f32 %v497, 0.6931472
    %v499 = vmul.f32 -0.5, %v237
    %v500 = vadd.f32 %v499, 1.0
    %v501 = vmul.f32 %v500, %v237
    %v502 = vand.u32 2147483647, %v237
    %vm503 = vcmp.lt.f32.partialorder %v502, 0.0004427343
    %v504 = vsel %vm503, %v501, %v498
    %v505 = vadd.f32 %v239, 1.0
    %v506 = vlog2.pop %v505
    %v507 = vmul.f32 %v506, 0.6931472
    %v508 = vmul.f32 -0.5, %v239
    %v509 = vadd.f32 %v508, 1.0
    %v510 = vmul.f32 %v509, %v239
    %v511 = vand.u32 2147483647, %v239
    %vm512 = vcmp.lt.f32.partialorder %v511, 0.0004427343
    %v513 = vsel %vm512, %v510, %v507
    %v514 = vadd.f32 %v241, 1.0
    %v515 = vlog2.pop %v514
    %v516 = vmul.f32 %v515, 0.6931472
    %v517 = vmul.f32 -0.5, %v241
    %v518 = vadd.f32 %v517, 1.0
    %v519 = vmul.f32 %v518, %v241
    %v520 = vand.u32 2147483647, %v241
    %vm521 = vcmp.lt.f32.partialorder %v520, 0.0004427343
    %v522 = vsel %vm521, %v519, %v516
    %v523 = vadd.f32 %v243, 1.0
    %v524 = vlog2.pop %v523
    %v525 = vmul.f32 %v524, 0.6931472
    %v526 = vmul.f32 -0.5, %v243
    %v527 = vadd.f32 %v526, 1.0
    %v528 = vmul.f32 %v527, %v243
    %v529 = vand.u32 2147483647, %v243
    %vm530 = vcmp.lt.f32.partialorder %v529, 0.0004427343
    %v531 = vsel %vm530, %v528, %v525
    %v532 = vadd.f32 %v84, %v252
    %v533 = vadd.f32 %v85, %v261
    %v534 = vadd.f32 %v86, %v270
    %v535 = vadd.f32 %v87, %v279
    %v536 = vadd.f32 %v88, %v288
    %v537 = vadd.f32 %v89, %v297
    %v538 = vadd.f32 %v90, %v306
    %v539 = vadd.f32 %v91, %v315
    %v540 = vadd.f32 %v92, %v324
    %v541 = vadd.f32 %v93, %v333
    %v542 = vadd.f32 %v94, %v342
    %v543 = vadd.f32 %v95, %v351
    %v544 = vadd.f32 %v96, %v360
    %v545 = vadd.f32 %v97, %v369
    %v546 = vadd.f32 %v98, %v378
    %v547 = vadd.f32 %v99, %v387
    %v548 = vadd.f32 %v100, %v396
    %v549 = vadd.f32 %v101, %v405
    %v550 = vadd.f32 %v102, %v414
    %v551 = vadd.f32 %v103, %v423
    %v552 = vadd.f32 %v104, %v432
    %v553 = vadd.f32 %v105, %v441
    %v554 = vadd.f32 %v106, %v450
    %v555 = vadd.f32 %v107, %v459
    %v556 = vadd.f32 %v108, %v468
    %v557 = vadd.f32 %v109, %v477
    %v558 = vadd.f32 %v110, %v486
    %v559 = vadd.f32 %v111, %v495
    %v560 = vadd.f32 %v112, %v504
    %v561 = vadd.f32 %v113, %v513
    %v562 = vadd.f32 %v114, %v522
    %v563 = vadd.f32 %v115, %v531
    %v564 = vld [vmem:[%s4] sm:$0xff]
    %v565 = vld [vmem:[%s4 + $0x8] sm:$0xff]
    %v566 = vld [vmem:[%s4 + $0x10] sm:$0xff]
    %v567 = vld [vmem:[%s4 + $0x18] sm:$0xff]
    %v568 = vld [vmem:[%s4 + $0x20] sm:$0xff]
    %v569 = vld [vmem:[%s4 + $0x28] sm:$0xff]
    %v570 = vld [vmem:[%s4 + $0x30] sm:$0xff]
    %v571 = vld [vmem:[%s4 + $0x38] sm:$0xff]
    %v572 = vld [vmem:[%s4 + $0x40] sm:$0xff]
    %v573 = vld [vmem:[%s4 + $0x48] sm:$0xff]
    %v574 = vld [vmem:[%s4 + $0x50] sm:$0xff]
    %v575 = vld [vmem:[%s4 + $0x58] sm:$0xff]
    %v576 = vld [vmem:[%s4 + $0x60] sm:$0xff]
    %v577 = vld [vmem:[%s4 + $0x68] sm:$0xff]
    %v578 = vld [vmem:[%s4 + $0x70] sm:$0xff]
    %v579 = vld [vmem:[%s4 + $0x78] sm:$0xff]
    %v580 = vld [vmem:[%s4 + $0x80] sm:$0xff]
    %v581 = vld [vmem:[%s4 + $0x88] sm:$0xff]
    %v582 = vld [vmem:[%s4 + $0x90] sm:$0xff]
    %v583 = vld [vmem:[%s4 + $0x98] sm:$0xff]
    %v584 = vld [vmem:[%s4 + $0xa0] sm:$0xff]
    %v585 = vld [vmem:[%s4 + $0xa8] sm:$0xff]
    %v586 = vld [vmem:[%s4 + $0xb0] sm:$0xff]
    %v587 = vld [vmem:[%s4 + $0xb8] sm:$0xff]
    %v588 = vld [vmem:[%s4 + $0xc0] sm:$0xff]
    %v589 = vld [vmem:[%s4 + $0xc8] sm:$0xff]
    %v590 = vld [vmem:[%s4 + $0xd0] sm:$0xff]
    %v591 = vld [vmem:[%s4 + $0xd8] sm:$0xff]
    %v592 = vld [vmem:[%s4 + $0xe0] sm:$0xff]
    %v593 = vld [vmem:[%s4 + $0xe8] sm:$0xff]
    %v594 = vld [vmem:[%s4 + $0xf0] sm:$0xff]
    %v595 = vld [vmem:[%s4 + $0xf8] sm:$0xff]
    %v596 = vld [vmem:[%s5] sm:$0xff]
    %v597 = vld [vmem:[%s5 + $0x8] sm:$0xff]
    %v598 = vld [vmem:[%s5 + $0x10] sm:$0xff]
    %v599 = vld [vmem:[%s5 + $0x18] sm:$0xff]
    %v600 = vld [vmem:[%s5 + $0x20] sm:$0xff]
    %v601 = vld [vmem:[%s5 + $0x28] sm:$0xff]
    %v602 = vld [vmem:[%s5 + $0x30] sm:$0xff]
    %v603 = vld [vmem:[%s5 + $0x38] sm:$0xff]
    %v604 = vld [vmem:[%s5 + $0x40] sm:$0xff]
    %v605 = vld [vmem:[%s5 + $0x48] sm:$0xff]
    %v606 = vld [vmem:[%s5 + $0x50] sm:$0xff]
    %v607 = vld [vmem:[%s5 + $0x58] sm:$0xff]
    %v608 = vld [vmem:[%s5 + $0x60] sm:$0xff]
    %v609 = vld [vmem:[%s5 + $0x68] sm:$0xff]
    %v610 = vld [vmem:[%s5 + $0x70] sm:$0xff]
    %v611 = vld [vmem:[%s5 + $0x78] sm:$0xff]
    %v612 = vld [vmem:[%s5 + $0x80] sm:$0xff]
    %v613 = vld [vmem:[%s5 + $0x88] sm:$0xff]
    %v614 = vld [vmem:[%s5 + $0x90] sm:$0xff]
    %v615 = vld [vmem:[%s5 + $0x98] sm:$0xff]
    %v616 = vld [vmem:[%s5 + $0xa0] sm:$0xff]
    %v617 = vld [vmem:[%s5 + $0xa8] sm:$0xff]
    %v618 = vld [vmem:[%s5 + $0xb0] sm:$0xff]
    %v619 = vld [vmem:[%s5 + $0xb8] sm:$0xff]
    %v620 = vld [vmem:[%s5 + $0xc0] sm:$0xff]
    %v621 = vld [vmem:[%s5 + $0xc8] sm:$0xff]
    %v622 = vld [vmem:[%s5 + $0xd0] sm:$0xff]
    %v623 = vld [vmem:[%s5 + $0xd8] sm:$0xff]
    %v624 = vld [vmem:[%s5 + $0xe0] sm:$0xff]
    %v625 = vld [vmem:[%s5 + $0xe8] sm:$0xff]
    %v626 = vld [vmem:[%s5 + $0xf0] sm:$0xff]
    %v627 = vld [vmem:[%s5 + $0xf8] sm:$0xff]
    %v628 = vmax.f32 %v596, 0.0
    %v629 = vmax.f32 %v597, 0.0
    %v630 = vmax.f32 %v598, 0.0
    %v631 = vmax.f32 %v599, 0.0
    %v632 = vmax.f32 %v600, 0.0
    %v633 = vmax.f32 %v601, 0.0
    %v634 = vmax.f32 %v602, 0.0
    %v635 = vmax.f32 %v603, 0.0
    %v636 = vmax.f32 %v604, 0.0
    %v637 = vmax.f32 %v605, 0.0
    %v638 = vmax.f32 %v606, 0.0
    %v639 = vmax.f32 %v607, 0.0
    %v640 = vmax.f32 %v608, 0.0
    %v641 = vmax.f32 %v609, 0.0
    %v642 = vmax.f32 %v610, 0.0
    %v643 = vmax.f32 %v611, 0.0
    %v644 = vmax.f32 %v612, 0.0
    %v645 = vmax.f32 %v613, 0.0
    %v646 = vmax.f32 %v614, 0.0
    %v647 = vmax.f32 %v615, 0.0
    %v648 = vmax.f32 %v616, 0.0
    %v649 = vmax.f32 %v617, 0.0
    %v650 = vmax.f32 %v618, 0.0
    %v651 = vmax.f32 %v619, 0.0
    %v652 = vmax.f32 %v620, 0.0
    %v653 = vmax.f32 %v621, 0.0
    %v654 = vmax.f32 %v622, 0.0
    %v655 = vmax.f32 %v623, 0.0
    %v656 = vmax.f32 %v624, 0.0
    %v657 = vmax.f32 %v625, 0.0
    %v658 = vmax.f32 %v626, 0.0
    %v659 = vmax.f32 %v627, 0.0
    %v660 = vand.u32 2147483647, %v596
    %v661 = vand.u32 2147483647, %v597
    %v662 = vand.u32 2147483647, %v598
    %v663 = vand.u32 2147483647, %v599
    %v664 = vand.u32 2147483647, %v600
    %v665 = vand.u32 2147483647, %v601
    %v666 = vand.u32 2147483647, %v602
    %v667 = vand.u32 2147483647, %v603
    %v668 = vand.u32 2147483647, %v604
    %v669 = vand.u32 2147483647, %v605
    %v670 = vand.u32 2147483647, %v606
    %v671 = vand.u32 2147483647, %v607
    %v672 = vand.u32 2147483647, %v608
    %v673 = vand.u32 2147483647, %v609
    %v674 = vand.u32 2147483647, %v610
    %v675 = vand.u32 2147483647, %v611
    %v676 = vand.u32 2147483647, %v612
    %v677 = vand.u32 2147483647, %v613
    %v678 = vand.u32 2147483647, %v614
    %v679 = vand.u32 2147483647, %v615
    %v680 = vand.u32 2147483647, %v616
    %v681 = vand.u32 2147483647, %v617
    %v682 = vand.u32 2147483647, %v618
    %v683 = vand.u32 2147483647, %v619
    %v684 = vand.u32 2147483647, %v620
    %v685 = vand.u32 2147483647, %v621
    %v686 = vand.u32 2147483647, %v622
    %v687 = vand.u32 2147483647, %v623
    %v688 = vand.u32 2147483647, %v624
    %v689 = vand.u32 2147483647, %v625
    %v690 = vand.u32 2147483647, %v626
    %v691 = vand.u32 2147483647, %v627
    %v692 = vsub.f32 0.0, %v660
    %v693 = vsub.f32 0.0, %v661
    %v694 = vsub.f32 0.0, %v662
    %v695 = vsub.f32 0.0, %v663
    %v696 = vsub.f32 0.0, %v664
    %v697 = vsub.f32 0.0, %v665
    %v698 = vsub.f32 0.0, %v666
    %v699 = vsub.f32 0.0, %v667
    %v700 = vsub.f32 0.0, %v668
    %v701 = vsub.f32 0.0, %v669
    %v702 = vsub.f32 0.0, %v670
    %v703 = vsub.f32 0.0, %v671
    %v704 = vsub.f32 0.0, %v672
    %v705 = vsub.f32 0.0, %v673
    %v706 = vsub.f32 0.0, %v674
    %v707 = vsub.f32 0.0, %v675
    %v708 = vsub.f32 0.0, %v676
    %v709 = vsub.f32 0.0, %v677
    %v710 = vsub.f32 0.0, %v678
    %v711 = vsub.f32 0.0, %v679
    %v712 = vsub.f32 0.0, %v680
    %v713 = vsub.f32 0.0, %v681
    %v714 = vsub.f32 0.0, %v682
    %v715 = vsub.f32 0.0, %v683
    %v716 = vsub.f32 0.0, %v684
    %v717 = vsub.f32 0.0, %v685
    %v718 = vsub.f32 0.0, %v686
    %v719 = vsub.f32 0.0, %v687
    %v720 = vsub.f32 0.0, %v688
    %v721 = vsub.f32 0.0, %v689
    %v722 = vsub.f32 0.0, %v690
    %v723 = vsub.f32 0.0, %v691
    %v724 = vmul.f32 %v692, 1.442695
    %v725 = vpow.pop %v724
    %v726 = vmul.f32 %v693, 1.442695
    %v727 = vpow.pop %v726
    %v728 = vmul.f32 %v694, 1.442695
    %v729 = vpow.pop %v728
    %v730 = vmul.f32 %v695, 1.442695
    %v731 = vpow.pop %v730
    %v732 = vmul.f32 %v696, 1.442695
    %v733 = vpow.pop %v732
    %v734 = vmul.f32 %v697, 1.442695
    %v735 = vpow.pop %v734
    %v736 = vmul.f32 %v698, 1.442695
    %v737 = vpow.pop %v736
    %v738 = vmul.f32 %v699, 1.442695
    %v739 = vpow.pop %v738
    %v740 = vmul.f32 %v700, 1.442695
    %v741 = vpow.pop %v740
    %v742 = vmul.f32 %v701, 1.442695
    %v743 = vpow.pop %v742
    %v744 = vmul.f32 %v702, 1.442695
    %v745 = vpow.pop %v744
    %v746 = vmul.f32 %v703, 1.442695
    %v747 = vpow.pop %v746
    %v748 = vmul.f32 %v704, 1.442695
    %v749 = vpow.pop %v748
    %v750 = vmul.f32 %v705, 1.442695
    %v751 = vpow.pop %v750
    %v752 = vmul.f32 %v706, 1.442695
    %v753 = vpow.pop %v752
    %v754 = vmul.f32 %v707, 1.442695
    %v755 = vpow.pop %v754
    %v756 = vmul.f32 %v708, 1.442695
    %v757 = vpow.pop %v756
    %v758 = vmul.f32 %v709, 1.442695
    %v759 = vpow.pop %v758
    %v760 = vmul.f32 %v710, 1.442695
    %v761 = vpow.pop %v760
    %v762 = vmul.f32 %v711, 1.442695
    %v763 = vpow.pop %v762
    %v764 = vmul.f32 %v712, 1.442695
    %v765 = vpow.pop %v764
    %v766 = vmul.f32 %v713, 1.442695
    %v767 = vpow.pop %v766
    %v768 = vmul.f32 %v714, 1.442695
    %v769 = vpow.pop %v768
    %v770 = vmul.f32 %v715, 1.442695
    %v771 = vpow.pop %v770
    %v772 = vmul.f32 %v716, 1.442695
    %v773 = vpow.pop %v772
    %v774 = vmul.f32 %v717, 1.442695
    %v775 = vpow.pop %v774
    %v776 = vmul.f32 %v718, 1.442695
    %v777 = vpow.pop %v776
    %v778 = vmul.f32 %v719, 1.442695
    %v779 = vpow.pop %v778
    %v780 = vmul.f32 %v720, 1.442695
    %v781 = vpow.pop %v780
    %v782 = vmul.f32 %v721, 1.442695
    %v783 = vpow.pop %v782
    %v784 = vmul.f32 %v722, 1.442695
    %v785 = vpow.pop %v784
    %v786 = vmul.f32 %v723, 1.442695
    %v787 = vpow.pop %v786
    %v788 = vadd.f32 %v725, 1.0
    %v789 = vlog2.pop %v788
    %v790 = vmul.f32 %v789, 0.6931472
    %v791 = vmul.f32 -0.5, %v725
    %v792 = vadd.f32 %v791, 1.0
    %v793 = vmul.f32 %v792, %v725
    %v794 = vand.u32 2147483647, %v725
    %vm795 = vcmp.lt.f32.partialorder %v794, 0.0004427343
    %v796 = vsel %vm795, %v793, %v790
    %v797 = vadd.f32 %v727, 1.0
    %v798 = vlog2.pop %v797
    %v799 = vmul.f32 %v798, 0.6931472
    %v800 = vmul.f32 -0.5, %v727
    %v801 = vadd.f32 %v800, 1.0
    %v802 = vmul.f32 %v801, %v727
    %v803 = vand.u32 2147483647, %v727
    %vm804 = vcmp.lt.f32.partialorder %v803, 0.0004427343
    %v805 = vsel %vm804, %v802, %v799
    %v806 = vadd.f32 %v729, 1.0
    %v807 = vlog2.pop %v806
    %v808 = vmul.f32 %v807, 0.6931472
    %v809 = vmul.f32 -0.5, %v729
    %v810 = vadd.f32 %v809, 1.0
    %v811 = vmul.f32 %v810, %v729
    %v812 = vand.u32 2147483647, %v729
    %vm813 = vcmp.lt.f32.partialorder %v812, 0.0004427343
    %v814 = vsel %vm813, %v811, %v808
    %v815 = vadd.f32 %v731, 1.0
    %v816 = vlog2.pop %v815
    %v817 = vmul.f32 %v816, 0.6931472
    %v818 = vmul.f32 -0.5, %v731
    %v819 = vadd.f32 %v818, 1.0
    %v820 = vmul.f32 %v819, %v731
    %v821 = vand.u32 2147483647, %v731
    %vm822 = vcmp.lt.f32.partialorder %v821, 0.0004427343
    %v823 = vsel %vm822, %v820, %v817
    %v824 = vadd.f32 %v733, 1.0
    %v825 = vlog2.pop %v824
    %v826 = vmul.f32 %v825, 0.6931472
    %v827 = vmul.f32 -0.5, %v733
    %v828 = vadd.f32 %v827, 1.0
    %v829 = vmul.f32 %v828, %v733
    %v830 = vand.u32 2147483647, %v733
    %vm831 = vcmp.lt.f32.partialorder %v830, 0.0004427343
    %v832 = vsel %vm831, %v829, %v826
    %v833 = vadd.f32 %v735, 1.0
    %v834 = vlog2.pop %v833
    %v835 = vmul.f32 %v834, 0.6931472
    %v836 = vmul.f32 -0.5, %v735
    %v837 = vadd.f32 %v836, 1.0
    %v838 = vmul.f32 %v837, %v735
    %v839 = vand.u32 2147483647, %v735
    %vm840 = vcmp.lt.f32.partialorder %v839, 0.0004427343
    %v841 = vsel %vm840, %v838, %v835
    %v842 = vadd.f32 %v737, 1.0
    %v843 = vlog2.pop %v842
    %v844 = vmul.f32 %v843, 0.6931472
    %v845 = vmul.f32 -0.5, %v737
    %v846 = vadd.f32 %v845, 1.0
    %v847 = vmul.f32 %v846, %v737
    %v848 = vand.u32 2147483647, %v737
    %vm849 = vcmp.lt.f32.partialorder %v848, 0.0004427343
    %v850 = vsel %vm849, %v847, %v844
    %v851 = vadd.f32 %v739, 1.0
    %v852 = vlog2.pop %v851
    %v853 = vmul.f32 %v852, 0.6931472
    %v854 = vmul.f32 -0.5, %v739
    %v855 = vadd.f32 %v854, 1.0
    %v856 = vmul.f32 %v855, %v739
    %v857 = vand.u32 2147483647, %v739
    %vm858 = vcmp.lt.f32.partialorder %v857, 0.0004427343
    %v859 = vsel %vm858, %v856, %v853
    %v860 = vadd.f32 %v741, 1.0
    %v861 = vlog2.pop %v860
    %v862 = vmul.f32 %v861, 0.6931472
    %v863 = vmul.f32 -0.5, %v741
    %v864 = vadd.f32 %v863, 1.0
    %v865 = vmul.f32 %v864, %v741
    %v866 = vand.u32 2147483647, %v741
    %vm867 = vcmp.lt.f32.partialorder %v866, 0.0004427343
    %v868 = vsel %vm867, %v865, %v862
    %v869 = vadd.f32 %v743, 1.0
    %v870 = vlog2.pop %v869
    %v871 = vmul.f32 %v870, 0.6931472
    %v872 = vmul.f32 -0.5, %v743
    %v873 = vadd.f32 %v872, 1.0
    %v874 = vmul.f32 %v873, %v743
    %v875 = vand.u32 2147483647, %v743
    %vm876 = vcmp.lt.f32.partialorder %v875, 0.0004427343
    %v877 = vsel %vm876, %v874, %v871
    %v878 = vadd.f32 %v745, 1.0
    %v879 = vlog2.pop %v878
    %v880 = vmul.f32 %v879, 0.6931472
    %v881 = vmul.f32 -0.5, %v745
    %v882 = vadd.f32 %v881, 1.0
    %v883 = vmul.f32 %v882, %v745
    %v884 = vand.u32 2147483647, %v745
    %vm885 = vcmp.lt.f32.partialorder %v884, 0.0004427343
    %v886 = vsel %vm885, %v883, %v880
    %v887 = vadd.f32 %v747, 1.0
    %v888 = vlog2.pop %v887
    %v889 = vmul.f32 %v888, 0.6931472
    %v890 = vmul.f32 -0.5, %v747
    %v891 = vadd.f32 %v890, 1.0
    %v892 = vmul.f32 %v891, %v747
    %v893 = vand.u32 2147483647, %v747
    %vm894 = vcmp.lt.f32.partialorder %v893, 0.0004427343
    %v895 = vsel %vm894, %v892, %v889
    %v896 = vadd.f32 %v749, 1.0
    %v897 = vlog2.pop %v896
    %v898 = vmul.f32 %v897, 0.6931472
    %v899 = vmul.f32 -0.5, %v749
    %v900 = vadd.f32 %v899, 1.0
    %v901 = vmul.f32 %v900, %v749
    %v902 = vand.u32 2147483647, %v749
    %vm903 = vcmp.lt.f32.partialorder %v902, 0.0004427343
    %v904 = vsel %vm903, %v901, %v898
    %v905 = vadd.f32 %v751, 1.0
    %v906 = vlog2.pop %v905
    %v907 = vmul.f32 %v906, 0.6931472
    %v908 = vmul.f32 -0.5, %v751
    %v909 = vadd.f32 %v908, 1.0
    %v910 = vmul.f32 %v909, %v751
    %v911 = vand.u32 2147483647, %v751
    %vm912 = vcmp.lt.f32.partialorder %v911, 0.0004427343
    %v913 = vsel %vm912, %v910, %v907
    %v914 = vadd.f32 %v753, 1.0
    %v915 = vlog2.pop %v914
    %v916 = vmul.f32 %v915, 0.6931472
    %v917 = vmul.f32 -0.5, %v753
    %v918 = vadd.f32 %v917, 1.0
    %v919 = vmul.f32 %v918, %v753
    %v920 = vand.u32 2147483647, %v753
    %vm921 = vcmp.lt.f32.partialorder %v920, 0.0004427343
    %v922 = vsel %vm921, %v919, %v916
    %v923 = vadd.f32 %v755, 1.0
    %v924 = vlog2.pop %v923
    %v925 = vmul.f32 %v924, 0.6931472
    %v926 = vmul.f32 -0.5, %v755
    %v927 = vadd.f32 %v926, 1.0
    %v928 = vmul.f32 %v927, %v755
    %v929 = vand.u32 2147483647, %v755
    %vm930 = vcmp.lt.f32.partialorder %v929, 0.0004427343
    %v931 = vsel %vm930, %v928, %v925
    %v932 = vadd.f32 %v757, 1.0
    %v933 = vlog2.pop %v932
    %v934 = vmul.f32 %v933, 0.6931472
    %v935 = vmul.f32 -0.5, %v757
    %v936 = vadd.f32 %v935, 1.0
    %v937 = vmul.f32 %v936, %v757
    %v938 = vand.u32 2147483647, %v757
    %vm939 = vcmp.lt.f32.partialorder %v938, 0.0004427343
    %v940 = vsel %vm939, %v937, %v934
    %v941 = vadd.f32 %v759, 1.0
    %v942 = vlog2.pop %v941
    %v943 = vmul.f32 %v942, 0.6931472
    %v944 = vmul.f32 -0.5, %v759
    %v945 = vadd.f32 %v944, 1.0
    %v946 = vmul.f32 %v945, %v759
    %v947 = vand.u32 2147483647, %v759
    %vm948 = vcmp.lt.f32.partialorder %v947, 0.0004427343
    %v949 = vsel %vm948, %v946, %v943
    %v950 = vadd.f32 %v761, 1.0
    %v951 = vlog2.pop %v950
    %v952 = vmul.f32 %v951, 0.6931472
    %v953 = vmul.f32 -0.5, %v761
    %v954 = vadd.f32 %v953, 1.0
    %v955 = vmul.f32 %v954, %v761
    %v956 = vand.u32 2147483647, %v761
    %vm957 = vcmp.lt.f32.partialorder %v956, 0.0004427343
    %v958 = vsel %vm957, %v955, %v952
    %v959 = vadd.f32 %v763, 1.0
    %v960 = vlog2.pop %v959
    %v961 = vmul.f32 %v960, 0.6931472
    %v962 = vmul.f32 -0.5, %v763
    %v963 = vadd.f32 %v962, 1.0
    %v964 = vmul.f32 %v963, %v763
    %v965 = vand.u32 2147483647, %v763
    %vm966 = vcmp.lt.f32.partialorder %v965, 0.0004427343
    %v967 = vsel %vm966, %v964, %v961
    %v968 = vadd.f32 %v765, 1.0
    %v969 = vlog2.pop %v968
    %v970 = vmul.f32 %v969, 0.6931472
    %v971 = vmul.f32 -0.5, %v765
    %v972 = vadd.f32 %v971, 1.0
    %v973 = vmul.f32 %v972, %v765
    %v974 = vand.u32 2147483647, %v765
    %vm975 = vcmp.lt.f32.partialorder %v974, 0.0004427343
    %v976 = vsel %vm975, %v973, %v970
    %v977 = vadd.f32 %v767, 1.0
    %v978 = vlog2.pop %v977
    %v979 = vmul.f32 %v978, 0.6931472
    %v980 = vmul.f32 -0.5, %v767
    %v981 = vadd.f32 %v980, 1.0
    %v982 = vmul.f32 %v981, %v767
    %v983 = vand.u32 2147483647, %v767
    %vm984 = vcmp.lt.f32.partialorder %v983, 0.0004427343
    %v985 = vsel %vm984, %v982, %v979
    %v986 = vadd.f32 %v769, 1.0
    %v987 = vlog2.pop %v986
    %v988 = vmul.f32 %v987, 0.6931472
    %v989 = vmul.f32 -0.5, %v769
    %v990 = vadd.f32 %v989, 1.0
    %v991 = vmul.f32 %v990, %v769
    %v992 = vand.u32 2147483647, %v769
    %vm993 = vcmp.lt.f32.partialorder %v992, 0.0004427343
    %v994 = vsel %vm993, %v991, %v988
    %v995 = vadd.f32 %v771, 1.0
    %v996 = vlog2.pop %v995
    %v997 = vmul.f32 %v996, 0.6931472
    %v998 = vmul.f32 -0.5, %v771
    %v999 = vadd.f32 %v998, 1.0
    %v1000 = vmul.f32 %v999, %v771
    %v1001 = vand.u32 2147483647, %v771
    %vm1002 = vcmp.lt.f32.partialorder %v1001, 0.0004427343
    %v1003 = vsel %vm1002, %v1000, %v997
    %v1004 = vadd.f32 %v773, 1.0
    %v1005 = vlog2.pop %v1004
    %v1006 = vmul.f32 %v1005, 0.6931472
    %v1007 = vmul.f32 -0.5, %v773
    %v1008 = vadd.f32 %v1007, 1.0
    %v1009 = vmul.f32 %v1008, %v773
    %v1010 = vand.u32 2147483647, %v773
    %vm1011 = vcmp.lt.f32.partialorder %v1010, 0.0004427343
    %v1012 = vsel %vm1011, %v1009, %v1006
    %v1013 = vadd.f32 %v775, 1.0
    %v1014 = vlog2.pop %v1013
    %v1015 = vmul.f32 %v1014, 0.6931472
    %v1016 = vmul.f32 -0.5, %v775
    %v1017 = vadd.f32 %v1016, 1.0
    %v1018 = vmul.f32 %v1017, %v775
    %v1019 = vand.u32 2147483647, %v775
    %vm1020 = vcmp.lt.f32.partialorder %v1019, 0.0004427343
    %v1021 = vsel %vm1020, %v1018, %v1015
    %v1022 = vadd.f32 %v777, 1.0
    %v1023 = vlog2.pop %v1022
    %v1024 = vmul.f32 %v1023, 0.6931472
    %v1025 = vmul.f32 -0.5, %v777
    %v1026 = vadd.f32 %v1025, 1.0
    %v1027 = vmul.f32 %v1026, %v777
    %v1028 = vand.u32 2147483647, %v777
    %vm1029 = vcmp.lt.f32.partialorder %v1028, 0.0004427343
    %v1030 = vsel %vm1029, %v1027, %v1024
    %v1031 = vadd.f32 %v779, 1.0
    %v1032 = vlog2.pop %v1031
    %v1033 = vmul.f32 %v1032, 0.6931472
    %v1034 = vmul.f32 -0.5, %v779
    %v1035 = vadd.f32 %v1034, 1.0
    %v1036 = vmul.f32 %v1035, %v779
    %v1037 = vand.u32 2147483647, %v779
    %vm1038 = vcmp.lt.f32.partialorder %v1037, 0.0004427343
    %v1039 = vsel %vm1038, %v1036, %v1033
    %v1040 = vadd.f32 %v781, 1.0
    %v1041 = vlog2.pop %v1040
    %v1042 = vmul.f32 %v1041, 0.6931472
    %v1043 = vmul.f32 -0.5, %v781
    %v1044 = vadd.f32 %v1043, 1.0
    %v1045 = vmul.f32 %v1044, %v781
    %v1046 = vand.u32 2147483647, %v781
    %vm1047 = vcmp.lt.f32.partialorder %v1046, 0.0004427343
    %v1048 = vsel %vm1047, %v1045, %v1042
    %v1049 = vadd.f32 %v783, 1.0
    %v1050 = vlog2.pop %v1049
    %v1051 = vmul.f32 %v1050, 0.6931472
    %v1052 = vmul.f32 -0.5, %v783
    %v1053 = vadd.f32 %v1052, 1.0
    %v1054 = vmul.f32 %v1053, %v783
    %v1055 = vand.u32 2147483647, %v783
    %vm1056 = vcmp.lt.f32.partialorder %v1055, 0.0004427343
    %v1057 = vsel %vm1056, %v1054, %v1051
    %v1058 = vadd.f32 %v785, 1.0
    %v1059 = vlog2.pop %v1058
    %v1060 = vmul.f32 %v1059, 0.6931472
    %v1061 = vmul.f32 -0.5, %v785
    %v1062 = vadd.f32 %v1061, 1.0
    %v1063 = vmul.f32 %v1062, %v785
    %v1064 = vand.u32 2147483647, %v785
    %vm1065 = vcmp.lt.f32.partialorder %v1064, 0.0004427343
    %v1066 = vsel %vm1065, %v1063, %v1060
    %v1067 = vadd.f32 %v787, 1.0
    %v1068 = vlog2.pop %v1067
    %v1069 = vmul.f32 %v1068, 0.6931472
    %v1070 = vmul.f32 -0.5, %v787
    %v1071 = vadd.f32 %v1070, 1.0
    %v1072 = vmul.f32 %v1071, %v787
    %v1073 = vand.u32 2147483647, %v787
    %vm1074 = vcmp.lt.f32.partialorder %v1073, 0.0004427343
    %v1075 = vsel %vm1074, %v1072, %v1069
    %v1076 = vadd.f32 %v628, %v796
    %v1077 = vadd.f32 %v629, %v805
    %v1078 = vadd.f32 %v630, %v814
    %v1079 = vadd.f32 %v631, %v823
    %v1080 = vadd.f32 %v632, %v832
    %v1081 = vadd.f32 %v633, %v841
    %v1082 = vadd.f32 %v634, %v850
    %v1083 = vadd.f32 %v635, %v859
    %v1084 = vadd.f32 %v636, %v868
    %v1085 = vadd.f32 %v637, %v877
    %v1086 = vadd.f32 %v638, %v886
    %v1087 = vadd.f32 %v639, %v895
    %v1088 = vadd.f32 %v640, %v904
    %v1089 = vadd.f32 %v641, %v913
    %v1090 = vadd.f32 %v642, %v922
    %v1091 = vadd.f32 %v643, %v931
    %v1092 = vadd.f32 %v644, %v940
    %v1093 = vadd.f32 %v645, %v949
    %v1094 = vadd.f32 %v646, %v958
    %v1095 = vadd.f32 %v647, %v967
    %v1096 = vadd.f32 %v648, %v976
    %v1097 = vadd.f32 %v649, %v985
    %v1098 = vadd.f32 %v650, %v994
    %v1099 = vadd.f32 %v651, %v1003
    %v1100 = vadd.f32 %v652, %v1012
    %v1101 = vadd.f32 %v653, %v1021
    %v1102 = vadd.f32 %v654, %v1030
    %v1103 = vadd.f32 %v655, %v1039
    %v1104 = vadd.f32 %v656, %v1048
    %v1105 = vadd.f32 %v657, %v1057
    %v1106 = vadd.f32 %v658, %v1066
    %v1107 = vadd.f32 %v659, %v1075
    %v1108 = vmul.f32 %v1076, 0.00390625
    %v1109 = vmul.f32 %v1077, 0.00390625
    %v1110 = vmul.f32 %v1078, 0.00390625
    %v1111 = vmul.f32 %v1079, 0.00390625
    %v1112 = vmul.f32 %v1080, 0.00390625
    %v1113 = vmul.f32 %v1081, 0.00390625
    %v1114 = vmul.f32 %v1082, 0.00390625
    %v1115 = vmul.f32 %v1083, 0.00390625
    %v1116 = vmul.f32 %v1084, 0.00390625
    %v1117 = vmul.f32 %v1085, 0.00390625
    %v1118 = vmul.f32 %v1086, 0.00390625
    %v1119 = vmul.f32 %v1087, 0.00390625
    %v1120 = vmul.f32 %v1088, 0.00390625
    %v1121 = vmul.f32 %v1089, 0.00390625
    %v1122 = vmul.f32 %v1090, 0.00390625
    %v1123 = vmul.f32 %v1091, 0.00390625
    %v1124 = vmul.f32 %v1092, 0.00390625
    %v1125 = vmul.f32 %v1093, 0.00390625
    %v1126 = vmul.f32 %v1094, 0.00390625
    %v1127 = vmul.f32 %v1095, 0.00390625
    %v1128 = vmul.f32 %v1096, 0.00390625
    %v1129 = vmul.f32 %v1097, 0.00390625
    %v1130 = vmul.f32 %v1098, 0.00390625
    %v1131 = vmul.f32 %v1099, 0.00390625
    %v1132 = vmul.f32 %v1100, 0.00390625
    %v1133 = vmul.f32 %v1101, 0.00390625
    %v1134 = vmul.f32 %v1102, 0.00390625
    %v1135 = vmul.f32 %v1103, 0.00390625
    %v1136 = vmul.f32 %v1104, 0.00390625
    %v1137 = vmul.f32 %v1105, 0.00390625
    %v1138 = vmul.f32 %v1106, 0.00390625
    %v1139 = vmul.f32 %v1107, 0.00390625
    %1141 = vset.pattern.permute.xlu0 0
    %1142 = vperm.xlu0 %1141, %v532
    %v1143 = vpop.permute.xlu0 %1142
    %1146 = vset.pattern.permute.xlu0 0
    %1147 = vperm.xlu0 %1146, %v533
    %v1148 = vpop.permute.xlu0 %1147
    %1151 = vset.pattern.permute.xlu0 0
    %1152 = vperm.xlu0 %1151, %v534
    %v1153 = vpop.permute.xlu0 %1152
    %1156 = vset.pattern.permute.xlu0 0
    %1157 = vperm.xlu0 %1156, %v535
    %v1158 = vpop.permute.xlu0 %1157
    %1161 = vset.pattern.permute.xlu0 0
    %1162 = vperm.xlu0 %1161, %v536
    %v1163 = vpop.permute.xlu0 %1162
    %1166 = vset.pattern.permute.xlu0 0
    %1167 = vperm.xlu0 %1166, %v537
    %v1168 = vpop.permute.xlu0 %1167
    %1171 = vset.pattern.permute.xlu0 0
    %1172 = vperm.xlu0 %1171, %v538
    %v1173 = vpop.permute.xlu0 %1172
    %1176 = vset.pattern.permute.xlu0 0
    %1177 = vperm.xlu0 %1176, %v539
    %v1178 = vpop.permute.xlu0 %1177
    %1181 = vset.pattern.permute.xlu0 0
    %1182 = vperm.xlu0 %1181, %v540
    %v1183 = vpop.permute.xlu0 %1182
    %1186 = vset.pattern.permute.xlu0 0
    %1187 = vperm.xlu0 %1186, %v541
    %v1188 = vpop.permute.xlu0 %1187
    %1191 = vset.pattern.permute.xlu0 0
    %1192 = vperm.xlu0 %1191, %v542
    %v1193 = vpop.permute.xlu0 %1192
    %1196 = vset.pattern.permute.xlu0 0
    %1197 = vperm.xlu0 %1196, %v543
    %v1198 = vpop.permute.xlu0 %1197
    %1201 = vset.pattern.permute.xlu0 0
    %1202 = vperm.xlu0 %1201, %v544
    %v1203 = vpop.permute.xlu0 %1202
    %1206 = vset.pattern.permute.xlu0 0
    %1207 = vperm.xlu0 %1206, %v545
    %v1208 = vpop.permute.xlu0 %1207
    %1211 = vset.pattern.permute.xlu0 0
    %1212 = vperm.xlu0 %1211, %v546
    %v1213 = vpop.permute.xlu0 %1212
    %1216 = vset.pattern.permute.xlu0 0
    %1217 = vperm.xlu0 %1216, %v547
    %v1218 = vpop.permute.xlu0 %1217
    %1221 = vset.pattern.permute.xlu0 0
    %1222 = vperm.xlu0 %1221, %v548
    %v1223 = vpop.permute.xlu0 %1222
    %1226 = vset.pattern.permute.xlu0 0
    %1227 = vperm.xlu0 %1226, %v549
    %v1228 = vpop.permute.xlu0 %1227
    %1231 = vset.pattern.permute.xlu0 0
    %1232 = vperm.xlu0 %1231, %v550
    %v1233 = vpop.permute.xlu0 %1232
    %1236 = vset.pattern.permute.xlu0 0
    %1237 = vperm.xlu0 %1236, %v551
    %v1238 = vpop.permute.xlu0 %1237
    %1241 = vset.pattern.permute.xlu0 0
    %1242 = vperm.xlu0 %1241, %v552
    %v1243 = vpop.permute.xlu0 %1242
    %1246 = vset.pattern.permute.xlu0 0
    %1247 = vperm.xlu0 %1246, %v553
    %v1248 = vpop.permute.xlu0 %1247
    %1251 = vset.pattern.permute.xlu0 0
    %1252 = vperm.xlu0 %1251, %v554
    %v1253 = vpop.permute.xlu0 %1252
    %1256 = vset.pattern.permute.xlu0 0
    %1257 = vperm.xlu0 %1256, %v555
    %v1258 = vpop.permute.xlu0 %1257
    %1261 = vset.pattern.permute.xlu0 0
    %1262 = vperm.xlu0 %1261, %v556
    %v1263 = vpop.permute.xlu0 %1262
    %1266 = vset.pattern.permute.xlu0 0
    %1267 = vperm.xlu0 %1266, %v557
    %v1268 = vpop.permute.xlu0 %1267
    %1271 = vset.pattern.permute.xlu0 0
    %1272 = vperm.xlu0 %1271, %v558
    %v1273 = vpop.permute.xlu0 %1272
    %1276 = vset.pattern.permute.xlu0 0
    %1277 = vperm.xlu0 %1276, %v559
    %v1278 = vpop.permute.xlu0 %1277
    %1281 = vset.pattern.permute.xlu0 0
    %1282 = vperm.xlu0 %1281, %v560
    %v1283 = vpop.permute.xlu0 %1282
    %1286 = vset.pattern.permute.xlu0 0
    %1287 = vperm.xlu0 %1286, %v561
    %v1288 = vpop.permute.xlu0 %1287
    %1291 = vset.pattern.permute.xlu0 0
    %1292 = vperm.xlu0 %1291, %v562
    %v1293 = vpop.permute.xlu0 %1292
    %1296 = vset.pattern.permute.xlu0 0
    %1297 = vperm.xlu0 %1296, %v563
    %v1298 = vpop.permute.xlu0 %1297
    %v1301 = vlaneseq
    %v1302 = vshrl.u32 %v1301, 7
    %v1303 = vsub.s32 0, %v1302
    %v1304 = vrot.slane %v51, %v1303
    %v1306 = vmul.f32 %v1143, %v1304
    %v1307 = vmul.f32 %v1148, %v1304
    %v1308 = vmul.f32 %v1153, %v1304
    %v1309 = vmul.f32 %v1158, %v1304
    %v1310 = vmul.f32 %v1163, %v1304
    %v1311 = vmul.f32 %v1168, %v1304
    %v1312 = vmul.f32 %v1173, %v1304
    %v1313 = vmul.f32 %v1178, %v1304
    %v1314 = vmul.f32 %v1183, %v1304
    %v1315 = vmul.f32 %v1188, %v1304
    %v1316 = vmul.f32 %v1193, %v1304
    %v1317 = vmul.f32 %v1198, %v1304
    %v1318 = vmul.f32 %v1203, %v1304
    %v1319 = vmul.f32 %v1208, %v1304
    %v1320 = vmul.f32 %v1213, %v1304
    %v1321 = vmul.f32 %v1218, %v1304
    %v1322 = vmul.f32 %v1223, %v1304
    %v1323 = vmul.f32 %v1228, %v1304
    %v1324 = vmul.f32 %v1233, %v1304
    %v1325 = vmul.f32 %v1238, %v1304
    %v1326 = vmul.f32 %v1243, %v1304
    %v1327 = vmul.f32 %v1248, %v1304
    %v1328 = vmul.f32 %v1253, %v1304
    %v1329 = vmul.f32 %v1258, %v1304
    %v1330 = vmul.f32 %v1263, %v1304
    %v1331 = vmul.f32 %v1268, %v1304
    %v1332 = vmul.f32 %v1273, %v1304
    %v1333 = vmul.f32 %v1278, %v1304
    %v1334 = vmul.f32 %v1283, %v1304
    %v1335 = vmul.f32 %v1288, %v1304
    %v1336 = vmul.f32 %v1293, %v1304
    %v1337 = vmul.f32 %v1298, %v1304
    %1339 = vset.pattern.permute.xlu0 0
    %1340 = vperm.xlu0 %1339, %v564
    %v1341 = vpop.permute.xlu0 %1340
    %1344 = vset.pattern.permute.xlu0 0
    %1345 = vperm.xlu0 %1344, %v565
    %v1346 = vpop.permute.xlu0 %1345
    %1349 = vset.pattern.permute.xlu0 0
    %1350 = vperm.xlu0 %1349, %v566
    %v1351 = vpop.permute.xlu0 %1350
    %1354 = vset.pattern.permute.xlu0 0
    %1355 = vperm.xlu0 %1354, %v567
    %v1356 = vpop.permute.xlu0 %1355
    %1359 = vset.pattern.permute.xlu0 0
    %1360 = vperm.xlu0 %1359, %v568
    %v1361 = vpop.permute.xlu0 %1360
    %1364 = vset.pattern.permute.xlu0 0
    %1365 = vperm.xlu0 %1364, %v569
    %v1366 = vpop.permute.xlu0 %1365
    %1369 = vset.pattern.permute.xlu0 0
    %1370 = vperm.xlu0 %1369, %v570
    %v1371 = vpop.permute.xlu0 %1370
    %1374 = vset.pattern.permute.xlu0 0
    %1375 = vperm.xlu0 %1374, %v571
    %v1376 = vpop.permute.xlu0 %1375
    %1379 = vset.pattern.permute.xlu0 0
    %1380 = vperm.xlu0 %1379, %v572
    %v1381 = vpop.permute.xlu0 %1380
    %1384 = vset.pattern.permute.xlu0 0
    %1385 = vperm.xlu0 %1384, %v573
    %v1386 = vpop.permute.xlu0 %1385
    %1389 = vset.pattern.permute.xlu0 0
    %1390 = vperm.xlu0 %1389, %v574
    %v1391 = vpop.permute.xlu0 %1390
    %1394 = vset.pattern.permute.xlu0 0
    %1395 = vperm.xlu0 %1394, %v575
    %v1396 = vpop.permute.xlu0 %1395
    %1399 = vset.pattern.permute.xlu0 0
    %1400 = vperm.xlu0 %1399, %v576
    %v1401 = vpop.permute.xlu0 %1400
    %1404 = vset.pattern.permute.xlu0 0
    %1405 = vperm.xlu0 %1404, %v577
    %v1406 = vpop.permute.xlu0 %1405
    %1409 = vset.pattern.permute.xlu0 0
    %1410 = vperm.xlu0 %1409, %v578
    %v1411 = vpop.permute.xlu0 %1410
    %1414 = vset.pattern.permute.xlu0 0
    %1415 = vperm.xlu0 %1414, %v579
    %v1416 = vpop.permute.xlu0 %1415
    %1419 = vset.pattern.permute.xlu0 0
    %1420 = vperm.xlu0 %1419, %v580
    %v1421 = vpop.permute.xlu0 %1420
    %1424 = vset.pattern.permute.xlu0 0
    %1425 = vperm.xlu0 %1424, %v581
    %v1426 = vpop.permute.xlu0 %1425
    %1429 = vset.pattern.permute.xlu0 0
    %1430 = vperm.xlu0 %1429, %v582
    %v1431 = vpop.permute.xlu0 %1430
    %1434 = vset.pattern.permute.xlu0 0
    %1435 = vperm.xlu0 %1434, %v583
    %v1436 = vpop.permute.xlu0 %1435
    %1439 = vset.pattern.permute.xlu0 0
    %1440 = vperm.xlu0 %1439, %v584
    %v1441 = vpop.permute.xlu0 %1440
    %1444 = vset.pattern.permute.xlu0 0
    %1445 = vperm.xlu0 %1444, %v585
    %v1446 = vpop.permute.xlu0 %1445
    %1449 = vset.pattern.permute.xlu0 0
    %1450 = vperm.xlu0 %1449, %v586
    %v1451 = vpop.permute.xlu0 %1450
    %1454 = vset.pattern.permute.xlu0 0
    %1455 = vperm.xlu0 %1454, %v587
    %v1456 = vpop.permute.xlu0 %1455
    %1459 = vset.pattern.permute.xlu0 0
    %1460 = vperm.xlu0 %1459, %v588
    %v1461 = vpop.permute.xlu0 %1460
    %1464 = vset.pattern.permute.xlu0 0
    %1465 = vperm.xlu0 %1464, %v589
    %v1466 = vpop.permute.xlu0 %1465
    %1469 = vset.pattern.permute.xlu0 0
    %1470 = vperm.xlu0 %1469, %v590
    %v1471 = vpop.permute.xlu0 %1470
    %1474 = vset.pattern.permute.xlu0 0
    %1475 = vperm.xlu0 %1474, %v591
    %v1476 = vpop.permute.xlu0 %1475
    %1479 = vset.pattern.permute.xlu0 0
    %1480 = vperm.xlu0 %1479, %v592
    %v1481 = vpop.permute.xlu0 %1480
    %1484 = vset.pattern.permute.xlu0 0
    %1485 = vperm.xlu0 %1484, %v593
    %v1486 = vpop.permute.xlu0 %1485
    %1489 = vset.pattern.permute.xlu0 0
    %1490 = vperm.xlu0 %1489, %v594
    %v1491 = vpop.permute.xlu0 %1490
    %1494 = vset.pattern.permute.xlu0 0
    %1495 = vperm.xlu0 %1494, %v595
    %v1496 = vpop.permute.xlu0 %1495
    %v1498 = vadd.f32 %v1306, %v1341
    %v1499 = vadd.f32 %v1307, %v1346
    %v1500 = vadd.f32 %v1308, %v1351
    %v1501 = vadd.f32 %v1309, %v1356
    %v1502 = vadd.f32 %v1310, %v1361
    %v1503 = vadd.f32 %v1311, %v1366
    %v1504 = vadd.f32 %v1312, %v1371
    %v1505 = vadd.f32 %v1313, %v1376
    %v1506 = vadd.f32 %v1314, %v1381
    %v1507 = vadd.f32 %v1315, %v1386
    %v1508 = vadd.f32 %v1316, %v1391
    %v1509 = vadd.f32 %v1317, %v1396
    %v1510 = vadd.f32 %v1318, %v1401
    %v1511 = vadd.f32 %v1319, %v1406
    %v1512 = vadd.f32 %v1320, %v1411
    %v1513 = vadd.f32 %v1321, %v1416
    %v1514 = vadd.f32 %v1322, %v1421
    %v1515 = vadd.f32 %v1323, %v1426
    %v1516 = vadd.f32 %v1324, %v1431
    %v1517 = vadd.f32 %v1325, %v1436
    %v1518 = vadd.f32 %v1326, %v1441
    %v1519 = vadd.f32 %v1327, %v1446
    %v1520 = vadd.f32 %v1328, %v1451
    %v1521 = vadd.f32 %v1329, %v1456
    %v1522 = vadd.f32 %v1330, %v1461
    %v1523 = vadd.f32 %v1331, %v1466
    %v1524 = vadd.f32 %v1332, %v1471
    %v1525 = vadd.f32 %v1333, %v1476
    %v1526 = vadd.f32 %v1334, %v1481
    %v1527 = vadd.f32 %v1335, %v1486
    %v1528 = vadd.f32 %v1336, %v1491
    %v1529 = vadd.f32 %v1337, %v1496
    %v1530 = vmul.f32 %v1498, 0.5
    %v1531 = vmul.f32 %v1499, 0.5
    %v1532 = vmul.f32 %v1500, 0.5
    %v1533 = vmul.f32 %v1501, 0.5
    %v1534 = vmul.f32 %v1502, 0.5
    %v1535 = vmul.f32 %v1503, 0.5
    %v1536 = vmul.f32 %v1504, 0.5
    %v1537 = vmul.f32 %v1505, 0.5
    %v1538 = vmul.f32 %v1506, 0.5
    %v1539 = vmul.f32 %v1507, 0.5
    %v1540 = vmul.f32 %v1508, 0.5
    %v1541 = vmul.f32 %v1509, 0.5
    %v1542 = vmul.f32 %v1510, 0.5
    %v1543 = vmul.f32 %v1511, 0.5
    %v1544 = vmul.f32 %v1512, 0.5
    %v1545 = vmul.f32 %v1513, 0.5
    %v1546 = vmul.f32 %v1514, 0.5
    %v1547 = vmul.f32 %v1515, 0.5
    %v1548 = vmul.f32 %v1516, 0.5
    %v1549 = vmul.f32 %v1517, 0.5
    %v1550 = vmul.f32 %v1518, 0.5
    %v1551 = vmul.f32 %v1519, 0.5
    %v1552 = vmul.f32 %v1520, 0.5
    %v1553 = vmul.f32 %v1521, 0.5
    %v1554 = vmul.f32 %v1522, 0.5
    %v1555 = vmul.f32 %v1523, 0.5
    %v1556 = vmul.f32 %v1524, 0.5
    %v1557 = vmul.f32 %v1525, 0.5
    %v1558 = vmul.f32 %v1526, 0.5
    %v1559 = vmul.f32 %v1527, 0.5
    %v1560 = vmul.f32 %v1528, 0.5
    %v1561 = vmul.f32 %v1529, 0.5
    %v1562 = vtanh.pop %v1530
    %v1563 = vtanh.pop %v1531
    %v1564 = vtanh.pop %v1532
    %v1565 = vtanh.pop %v1533
    %v1566 = vtanh.pop %v1534
    %v1567 = vtanh.pop %v1535
    %v1568 = vtanh.pop %v1536
    %v1569 = vtanh.pop %v1537
    %v1570 = vtanh.pop %v1538
    %v1571 = vtanh.pop %v1539
    %v1572 = vtanh.pop %v1540
    %v1573 = vtanh.pop %v1541
    %v1574 = vtanh.pop %v1542
    %v1575 = vtanh.pop %v1543
    %v1576 = vtanh.pop %v1544
    %v1577 = vtanh.pop %v1545
    %v1578 = vtanh.pop %v1546
    %v1579 = vtanh.pop %v1547
    %v1580 = vtanh.pop %v1548
    %v1581 = vtanh.pop %v1549
    %v1582 = vtanh.pop %v1550
    %v1583 = vtanh.pop %v1551
    %v1584 = vtanh.pop %v1552
    %v1585 = vtanh.pop %v1553
    %v1586 = vtanh.pop %v1554
    %v1587 = vtanh.pop %v1555
    %v1588 = vtanh.pop %v1556
    %v1589 = vtanh.pop %v1557
    %v1590 = vtanh.pop %v1558
    %v1591 = vtanh.pop %v1559
    %v1592 = vtanh.pop %v1560
    %v1593 = vtanh.pop %v1561
    %v1594 = vmul.f32 %v1562, 0.5
    %v1595 = vmul.f32 %v1563, 0.5
    %v1596 = vmul.f32 %v1564, 0.5
    %v1597 = vmul.f32 %v1565, 0.5
    %v1598 = vmul.f32 %v1566, 0.5
    %v1599 = vmul.f32 %v1567, 0.5
    %v1600 = vmul.f32 %v1568, 0.5
    %v1601 = vmul.f32 %v1569, 0.5
    %v1602 = vmul.f32 %v1570, 0.5
    %v1603 = vmul.f32 %v1571, 0.5
    %v1604 = vmul.f32 %v1572, 0.5
    %v1605 = vmul.f32 %v1573, 0.5
    %v1606 = vmul.f32 %v1574, 0.5
    %v1607 = vmul.f32 %v1575, 0.5
    %v1608 = vmul.f32 %v1576, 0.5
    %v1609 = vmul.f32 %v1577, 0.5
    %v1610 = vmul.f32 %v1578, 0.5
    %v1611 = vmul.f32 %v1579, 0.5
    %v1612 = vmul.f32 %v1580, 0.5
    %v1613 = vmul.f32 %v1581, 0.5
    %v1614 = vmul.f32 %v1582, 0.5
    %v1615 = vmul.f32 %v1583, 0.5
    %v1616 = vmul.f32 %v1584, 0.5
    %v1617 = vmul.f32 %v1585, 0.5
    %v1618 = vmul.f32 %v1586, 0.5
    %v1619 = vmul.f32 %v1587, 0.5
    %v1620 = vmul.f32 %v1588, 0.5
    %v1621 = vmul.f32 %v1589, 0.5
    %v1622 = vmul.f32 %v1590, 0.5
    %v1623 = vmul.f32 %v1591, 0.5
    %v1624 = vmul.f32 %v1592, 0.5
    %v1625 = vmul.f32 %v1593, 0.5
    %v1626 = vadd.f32 %v1594, 0.5
    %v1627 = vadd.f32 %v1595, 0.5
    %v1628 = vadd.f32 %v1596, 0.5
    %v1629 = vadd.f32 %v1597, 0.5
    %v1630 = vadd.f32 %v1598, 0.5
    %v1631 = vadd.f32 %v1599, 0.5
    %v1632 = vadd.f32 %v1600, 0.5
    %v1633 = vadd.f32 %v1601, 0.5
    %v1634 = vadd.f32 %v1602, 0.5
    %v1635 = vadd.f32 %v1603, 0.5
    %v1636 = vadd.f32 %v1604, 0.5
    %v1637 = vadd.f32 %v1605, 0.5
    %v1638 = vadd.f32 %v1606, 0.5
    %v1639 = vadd.f32 %v1607, 0.5
    %v1640 = vadd.f32 %v1608, 0.5
    %v1641 = vadd.f32 %v1609, 0.5
    %v1642 = vadd.f32 %v1610, 0.5
    %v1643 = vadd.f32 %v1611, 0.5
    %v1644 = vadd.f32 %v1612, 0.5
    %v1645 = vadd.f32 %v1613, 0.5
    %v1646 = vadd.f32 %v1614, 0.5
    %v1647 = vadd.f32 %v1615, 0.5
    %v1648 = vadd.f32 %v1616, 0.5
    %v1649 = vadd.f32 %v1617, 0.5
    %v1650 = vadd.f32 %v1618, 0.5
    %v1651 = vadd.f32 %v1619, 0.5
    %v1652 = vadd.f32 %v1620, 0.5
    %v1653 = vadd.f32 %v1621, 0.5
    %v1654 = vadd.f32 %v1622, 0.5
    %v1655 = vadd.f32 %v1623, 0.5
    %v1656 = vadd.f32 %v1624, 0.5
    %v1657 = vadd.f32 %v1625, 0.5
    %1659 = vset.pattern.permute.xlu0 0
    %1660 = vperm.xlu0 %1659, %v1108
    %v1661 = vpop.permute.xlu0 %1660
    %1664 = vset.pattern.permute.xlu0 0
    %1665 = vperm.xlu0 %1664, %v1109
    %v1666 = vpop.permute.xlu0 %1665
    %1669 = vset.pattern.permute.xlu0 0
    %1670 = vperm.xlu0 %1669, %v1110
    %v1671 = vpop.permute.xlu0 %1670
    %1674 = vset.pattern.permute.xlu0 0
    %1675 = vperm.xlu0 %1674, %v1111
    %v1676 = vpop.permute.xlu0 %1675
    %1679 = vset.pattern.permute.xlu0 0
    %1680 = vperm.xlu0 %1679, %v1112
    %v1681 = vpop.permute.xlu0 %1680
    %1684 = vset.pattern.permute.xlu0 0
    %1685 = vperm.xlu0 %1684, %v1113
    %v1686 = vpop.permute.xlu0 %1685
    %1689 = vset.pattern.permute.xlu0 0
    %1690 = vperm.xlu0 %1689, %v1114
    %v1691 = vpop.permute.xlu0 %1690
    %1694 = vset.pattern.permute.xlu0 0
    %1695 = vperm.xlu0 %1694, %v1115
    %v1696 = vpop.permute.xlu0 %1695
    %1699 = vset.pattern.permute.xlu0 0
    %1700 = vperm.xlu0 %1699, %v1116
    %v1701 = vpop.permute.xlu0 %1700
    %1704 = vset.pattern.permute.xlu0 0
    %1705 = vperm.xlu0 %1704, %v1117
    %v1706 = vpop.permute.xlu0 %1705
    %1709 = vset.pattern.permute.xlu0 0
    %1710 = vperm.xlu0 %1709, %v1118
    %v1711 = vpop.permute.xlu0 %1710
    %1714 = vset.pattern.permute.xlu0 0
    %1715 = vperm.xlu0 %1714, %v1119
    %v1716 = vpop.permute.xlu0 %1715
    %1719 = vset.pattern.permute.xlu0 0
    %1720 = vperm.xlu0 %1719, %v1120
    %v1721 = vpop.permute.xlu0 %1720
    %1724 = vset.pattern.permute.xlu0 0
    %1725 = vperm.xlu0 %1724, %v1121
    %v1726 = vpop.permute.xlu0 %1725
    %1729 = vset.pattern.permute.xlu0 0
    %1730 = vperm.xlu0 %1729, %v1122
    %v1731 = vpop.permute.xlu0 %1730
    %1734 = vset.pattern.permute.xlu0 0
    %1735 = vperm.xlu0 %1734, %v1123
    %v1736 = vpop.permute.xlu0 %1735
    %1739 = vset.pattern.permute.xlu0 0
    %1740 = vperm.xlu0 %1739, %v1124
    %v1741 = vpop.permute.xlu0 %1740
    %1744 = vset.pattern.permute.xlu0 0
    %1745 = vperm.xlu0 %1744, %v1125
    %v1746 = vpop.permute.xlu0 %1745
    %1749 = vset.pattern.permute.xlu0 0
    %1750 = vperm.xlu0 %1749, %v1126
    %v1751 = vpop.permute.xlu0 %1750
    %1754 = vset.pattern.permute.xlu0 0
    %1755 = vperm.xlu0 %1754, %v1127
    %v1756 = vpop.permute.xlu0 %1755
    %1759 = vset.pattern.permute.xlu0 0
    %1760 = vperm.xlu0 %1759, %v1128
    %v1761 = vpop.permute.xlu0 %1760
    %1764 = vset.pattern.permute.xlu0 0
    %1765 = vperm.xlu0 %1764, %v1129
    %v1766 = vpop.permute.xlu0 %1765
    %1769 = vset.pattern.permute.xlu0 0
    %1770 = vperm.xlu0 %1769, %v1130
    %v1771 = vpop.permute.xlu0 %1770
    %1774 = vset.pattern.permute.xlu0 0
    %1775 = vperm.xlu0 %1774, %v1131
    %v1776 = vpop.permute.xlu0 %1775
    %1779 = vset.pattern.permute.xlu0 0
    %1780 = vperm.xlu0 %1779, %v1132
    %v1781 = vpop.permute.xlu0 %1780
    %1784 = vset.pattern.permute.xlu0 0
    %1785 = vperm.xlu0 %1784, %v1133
    %v1786 = vpop.permute.xlu0 %1785
    %1789 = vset.pattern.permute.xlu0 0
    %1790 = vperm.xlu0 %1789, %v1134
    %v1791 = vpop.permute.xlu0 %1790
    %1794 = vset.pattern.permute.xlu0 0
    %1795 = vperm.xlu0 %1794, %v1135
    %v1796 = vpop.permute.xlu0 %1795
    %1799 = vset.pattern.permute.xlu0 0
    %1800 = vperm.xlu0 %1799, %v1136
    %v1801 = vpop.permute.xlu0 %1800
    %1804 = vset.pattern.permute.xlu0 0
    %1805 = vperm.xlu0 %1804, %v1137
    %v1806 = vpop.permute.xlu0 %1805
    %1809 = vset.pattern.permute.xlu0 0
    %1810 = vperm.xlu0 %1809, %v1138
    %v1811 = vpop.permute.xlu0 %1810
    %1814 = vset.pattern.permute.xlu0 0
    %1815 = vperm.xlu0 %1814, %v1139
    %v1816 = vpop.permute.xlu0 %1815
    %v1818 = vmul.f32 %v1626, %v1661
    %v1819 = vmul.f32 %v1627, %v1666
    %v1820 = vmul.f32 %v1628, %v1671
    %v1821 = vmul.f32 %v1629, %v1676
    %v1822 = vmul.f32 %v1630, %v1681
    %v1823 = vmul.f32 %v1631, %v1686
    %v1824 = vmul.f32 %v1632, %v1691
    %v1825 = vmul.f32 %v1633, %v1696
    %v1826 = vmul.f32 %v1634, %v1701
    %v1827 = vmul.f32 %v1635, %v1706
    %v1828 = vmul.f32 %v1636, %v1711
    %v1829 = vmul.f32 %v1637, %v1716
    %v1830 = vmul.f32 %v1638, %v1721
    %v1831 = vmul.f32 %v1639, %v1726
    %v1832 = vmul.f32 %v1640, %v1731
    %v1833 = vmul.f32 %v1641, %v1736
    %v1834 = vmul.f32 %v1642, %v1741
    %v1835 = vmul.f32 %v1643, %v1746
    %v1836 = vmul.f32 %v1644, %v1751
    %v1837 = vmul.f32 %v1645, %v1756
    %v1838 = vmul.f32 %v1646, %v1761
    %v1839 = vmul.f32 %v1647, %v1766
    %v1840 = vmul.f32 %v1648, %v1771
    %v1841 = vmul.f32 %v1649, %v1776
    %v1842 = vmul.f32 %v1650, %v1781
    %v1843 = vmul.f32 %v1651, %v1786
    %v1844 = vmul.f32 %v1652, %v1791
    %v1845 = vmul.f32 %v1653, %v1796
    %v1846 = vmul.f32 %v1654, %v1801
    %v1847 = vmul.f32 %v1655, %v1806
    %v1848 = vmul.f32 %v1656, %v1811
    %v1849 = vmul.f32 %v1657, %v1816
    %v1850 = vadd.f32 %v1818, %v1819
    %v1851 = vadd.f32 %v1850, %v1820
    %v1852 = vadd.f32 %v1851, %v1821
    %v1853 = vadd.f32 %v1852, %v1822
    %v1854 = vadd.f32 %v1853, %v1823
    %v1855 = vadd.f32 %v1854, %v1824
    %v1856 = vadd.f32 %v1855, %v1825
    %v1857 = vadd.f32 %v1856, %v1826
    %v1858 = vadd.f32 %v1857, %v1827
    %v1859 = vadd.f32 %v1858, %v1828
    %v1860 = vadd.f32 %v1859, %v1829
    %v1861 = vadd.f32 %v1860, %v1830
    %v1862 = vadd.f32 %v1861, %v1831
    %v1863 = vadd.f32 %v1862, %v1832
    %v1864 = vadd.f32 %v1863, %v1833
    %v1865 = vadd.f32 %v1864, %v1834
    %v1866 = vadd.f32 %v1865, %v1835
    %v1867 = vadd.f32 %v1866, %v1836
    %v1868 = vadd.f32 %v1867, %v1837
    %v1869 = vadd.f32 %v1868, %v1838
    %v1870 = vadd.f32 %v1869, %v1839
    %v1871 = vadd.f32 %v1870, %v1840
    %v1872 = vadd.f32 %v1871, %v1841
    %v1873 = vadd.f32 %v1872, %v1842
    %v1874 = vadd.f32 %v1873, %v1843
    %v1875 = vadd.f32 %v1874, %v1844
    %v1876 = vadd.f32 %v1875, %v1845
    %v1877 = vadd.f32 %v1876, %v1846
    %v1878 = vadd.f32 %v1877, %v1847
    %v1879 = vadd.f32 %v1878, %v1848
    %v1880 = vadd.f32 %v1879, %v1849
    %v1881 = vrot.slane %v1880, 4
    %v1882 = vadd.f32 %v1880, %v1881
    %v1883 = vrot.slane %v1882, 2
    %v1884 = vadd.f32 %v1882, %v1883
    %v1885 = vrot.slane %v1884, 1
    %v1886 = vadd.f32 %v1884, %v1885
    %v1887 = vadd.f32 %v1886, %v51
    %1888 = vst [vmem:[#allocation4] sm:$0x1] %v1887
    // Predicated region
    $region26: #{tpu_custom_call.1} parent=1 // pred_check
      _
    $region27: #{tpu_custom_call.1} parent=1 // pred_check_branch
      %1890 = sbr.rel (0) target = $region29
    $region28: #{tpu_custom_call.1} parent=1 // pred_region
      %s1892 = ssub.s32 16, 16
      %1893 = vsyncadd [#allocation5], %s1892
      %s1895 = sshll.u32 [#allocation4], 4
      %s1896 = int_to_ptr.vmem [resolvable:$true] %s1895
      %1898 = dma.vmem_to_hbm [thread:$0]  %s1896, 16, %s6, [#allocation5]
    $region29: #{tpu_custom_call.1} parent=1 // pred_fallthru
      _
    // Predicated region
    $region30: #{tpu_custom_call.1} parent=1 // pred_check
      _
    $region31: #{tpu_custom_call.1} parent=1 // pred_check_branch
      %1900 = sbr.rel (0) target = $region33
    $region32: #{tpu_custom_call.1} parent=1 // pred_region
      %1901 = dma.done [#allocation5], 16
    $region33: #{tpu_custom_call.1} parent=1 // pred_fallthru
      _
    %1902 = vsyncpa [#allocation5], 1

</llo_original>
